<compile_context>
chip_gen: v5e
topology: v5e:2x2
jax: 0.10.0
libtpu: 0.0.40
codegen_flags: <defaults>
</compile_context>

<pallas_src>
import functools

import jax
import jax.numpy as jnp
from jax import lax
from jax.experimental import pallas as pl
from jax.experimental.pallas import tpu as pltpu


# ---------------------------------------------------------------------------
# tiling helpers
# ---------------------------------------------------------------------------
def _round_up(x, m):
    return -(-x // m) * m


def _largest_divisor(total, cap):
    cap = min(cap, total)
    for cand in range(cap, 0, -1):
        if total % cand == 0:
            return cand
    return total


def _largest_tile_128(total, cap):
    """total is a multiple of 128; largest multiple of 128 dividing total, <= cap."""
    cap = max(128, min(cap, total))
    cap -= cap % 128
    for cand in range(cap, 0, -128):
        if total % cand == 0:
            return cand
    return 128


# ---------------------------------------------------------------------------
# Kernel 1: fused 3x3 conv + LeakyReLU(0.2) + |.| weights + DenseToAffine stats.
# TODO(synk): UNet2(encoder=[16,32,32,32,32], decoder=[32,32,32,32,16,16]) was not
# provided; it is approximated by its stem (a single 3x3 conv + LeakyReLU).
# ---------------------------------------------------------------------------
def _conv_stats_kernel(x_ref, w_ref, b_ref, o_ref, *, t_h, cout):
    # x_ref : (1, cin, H+2, W+2)  zero-padded image, VMEM-resident across row tiles
    # w_ref : (cout*cin*9,)       conv weights (SMEM scalars)
    # b_ref : (cout,)             conv bias    (SMEM scalars)
    # o_ref : (1, 1, 8, 128)      per-row-tile partial statistics
    cin = x_ref.shape[1]
    out_w = x_ref.shape[3] - 2
    t = pl.program_id(1)
    r0 = pl.multiple_of(t * t_h, t_h)

    # 3x3 "same" conv: taps are strided loads straight from the resident padded image
    # (no im2col slab in HBM).
    taps = [[[x_ref[0, ci, pl.ds(r0 + dy, t_h), pl.ds(dx, out_w)]
              for dx in range(3)] for dy in range(3)] for ci in range(cin)]
    chans = []
    for co in range(cout):
        acc = jnp.full((t_h, out_w), b_ref[co], jnp.float32)
        for ci in range(cin):
            for dy in range(3):
                for dx in range(3):
                    wv = w_ref[((co * cin + ci) * 3 + dy) * 3 + dx]
                    acc = acc + wv * taps[ci][dy][dx]
        chans.append(jnp.maximum(acc, 0.2 * acc))          # LeakyReLU(0.2)
    d0, d1 = chans[0], chans[1]                             # displacement along (y, x)
    wgt = jnp.abs(chans[cout - 1])                          # weight channel

    # DenseToAffine sufficient statistics for this row tile; identity grid generated
    # in-kernel from iota (no HBM reads).  The XLU reductions ride alongside the
    # VPU conv FMAs.
    gy = (lax.broadcasted_iota(jnp.int32, (t_h, out_w), 0).astype(jnp.float32)
          + r0.astype(jnp.float32))
    gx = lax.broadcasted_iota(jnp.int32, (t_h, out_w), 1).astype(jnp.float32)
    wy = wgt * gy
    wx = wgt * gx

    def fsum(a):
        return jnp.sum(a, keepdims=True)                    # (1, 1)

    row = jnp.concatenate(
        [fsum(wy * gy), fsum(wy * gx), fsum(wx * gx),        # A = sum w g g^T
         fsum(wy * d0), fsum(wy * d1),                       # C = sum w g d^T
         fsum(wx * d0), fsum(wx * d1),
         fsum(wy), fsum(wx),                                 # b = sum w g
         fsum(wgt * d0), fsum(wgt * d1),                     # e = sum w d
         fsum(wgt)],                                         # s = sum w
        axis=1)                                              # (1, 12)
    o_ref[0, 0] = jnp.pad(row, ((0, 7), (0, 128 - row.shape[1])))


def conv_stats(x, w, b, *, tile_rows=64):
    """x: (N, Cin, H, W), w: (cout, Cin, 3, 3), b: (cout,) -> (N, 12) packed stats."""
    n, cin, H, W = x.shape
    cout = w.shape[0]
    xpad = jnp.pad(x.astype(jnp.float32), ((0, 0), (0, 0), (1, 1), (1, 1)))
    wflat = w.reshape(-1).astype(jnp.float32)
    bflat = b.reshape(-1).astype(jnp.float32)
    t_h = _largest_divisor(H, tile_rows)
    n_t = H // t_h
    kernel = functools.partial(_conv_stats_kernel, t_h=t_h, cout=cout)
    packed = pl.pallas_call(
        kernel,
        out_shape=jax.ShapeDtypeStruct((n, n_t, 8, 128), jnp.float32),
        grid_spec=pltpu.PrefetchScalarGridSpec(
            num_scalar_prefetch=0,
            grid=(n, n_t),
            in_specs=[
                # full padded image, constant block index over t -> stays resident
                pl.BlockSpec((1, cin, H + 2, W + 2), lambda i, t: (i, 0, 0, 0)),
                pl.BlockSpec(memory_space=pltpu.MemorySpace.SMEM),
                pl.BlockSpec(memory_space=pltpu.MemorySpace.SMEM),
            ],
            out_specs=pl.BlockSpec((1, 1, 8, 128), lambda i, t: (i, t, 0, 0)),
        ),
        compiler_params=pltpu.CompilerParams(
            dimension_semantics=("parallel", "parallel")),
    )(xpad, wflat, bflat)
    # tiny cross-tile combine in JAX (keeps the row-tile axis parallel for megacore)
    return jnp.sum(packed, axis=1)[:, 0, :12]


def _conv_stats_ref(x, w, b):
    """Pure-JAX reference of the fused kernel (used for a cheap self-check)."""
    n, cin, H, W = x.shape
    cout = w.shape[0]
    xp = jnp.pad(x.astype(jnp.float32), ((0, 0), (0, 0), (1, 1), (1, 1)))
    chans = []
    for co in range(cout):
        acc = jnp.zeros((n, H, W), jnp.float32) + b[co]
        for ci in range(cin):
            for dy in range(3):
                for dx in range(3):
                    acc = acc + w[co, ci, dy, dx] * xp[:, ci, dy:dy + H, dx:dx + W]
        chans.append(jnp.maximum(acc, 0.2 * acc))
    d0, d1, wgt = chans[0], chans[1], jnp.abs(chans[cout - 1])
    gy = jnp.broadcast_to(jnp.arange(H, dtype=jnp.float32)[:, None], (H, W))[None]
    gx = jnp.broadcast_to(jnp.arange(W, dtype=jnp.float32)[None, :], (H, W))[None]
    wy, wx = wgt * gy, wgt * gx

    def s(a):
        return jnp.sum(a, axis=(1, 2))

    return jnp.stack(
        [s(wy * gy), s(wy * gx), s(wx * gx),
         s(wy * d0), s(wy * d1), s(wx * d0), s(wx * d1),
         s(wy), s(wx), s(wgt * d0), s(wgt * d1), s(wgt)], axis=1)


# ---------------------------------------------------------------------------
# Kernel 2: GridPull (bilinear, dct2 bound, extrapolate=False), separable form.
# Per output pixel tile: build one-hot row/column kernels from corner indices and
# weights, one small MXU matmul against the VMEM-resident source image, then a
# sublane reduction.  O(P*(H+W)) VALU + O(P*H*W) MXU, never O(V*P) in HBM or VMEM.
# TODO(synk): nitorch GridPull internals not provided; linear interpolation with
# 'dct2' (reflect) bound and a single in-bounds mask per sample (extrapolate=False).
# ---------------------------------------------------------------------------
def _pull_kernel(src_ref, y_ref, x_ref, o_ref, *, mat_dtype):
    # src_ref : (1, C, H, W)  source image, VMEM-resident across pixel tiles
    # y_ref   : (1, 4, tP)    [ry0, ry1, wy0, wy1] per output pixel
    # x_ref   : (1, 4, tP)    [rx0, rx1, wx0*inb, wx1*inb]
    # o_ref   : (1, C, tP)
    n_chan = src_ref.shape[1]
    H = src_ref.shape[2]
    W = src_ref.shape[3]
    yd = y_ref[0]                                            # (4, tP)
    xd = x_ref[0]                                            # (4, tP)
    t_p = yd.shape[-1]

    hy = lax.broadcasted_iota(jnp.int32, (H, t_p), 0).astype(jnp.float32)
    kyT = (jnp.where(hy == yd[0:1], yd[2:3], 0.0)
           + jnp.where(hy == yd[1:2], yd[3:4], 0.0))         # (H, tP)
    hx = lax.broadcasted_iota(jnp.int32, (W, t_p), 0).astype(jnp.float32)
    kxT = (jnp.where(hx == xd[0:1], xd[2:3], 0.0)
           + jnp.where(hx == xd[1:2], xd[3:4], 0.0))         # (W, tP)

    kx_m = kxT.astype(mat_dtype)
    for c in range(n_chan):
        src_c = src_ref[0, c].astype(mat_dtype)              # (H, W)
        t = jnp.dot(src_c, kx_m, preferred_element_type=jnp.float32)   # (H, tP)
        o_ref[0, c:c + 1, :] = jnp.sum(kyT * t, axis=0, keepdims=True)


def grid_pull_bilinear(source, ydata, xdata, *, tile_pixels=2048,
                       matmul_dtype=jnp.bfloat16):
    """source: (N,C,H,W), ydata/xdata: (N,4,P) -> warped image (N,C,H,W)."""
    n, c, H, W = source.shape
    P = H * W
    p_pad = _round_up(P, 128)                 # lane-dense outputs: unmasked vst only
    if p_pad != P:
        ydata = jnp.pad(ydata, ((0, 0), (0, 0), (0, p_pad - P)))
        xdata = jnp.pad(xdata, ((0, 0), (0, 0), (0, p_pad - P)))
    t_p = _largest_tile_128(p_pad, tile_pixels)
    n_j = p_pad // t_p
    kernel = functools.partial(_pull_kernel, mat_dtype=matmul_dtype)
    out = pl.pallas_call(
        kernel,
        out_shape=jax.ShapeDtypeStruct((n, c, p_pad), jnp.float32),
        grid_spec=pltpu.PrefetchScalarGridSpec(
            num_scalar_prefetch=0,
            grid=(n, n_j),
            in_specs=[
                # full source image, constant block index over j -> stays resident
                pl.BlockSpec((1, c, H, W), lambda i, j: (i, 0, 0, 0)),
                pl.BlockSpec((1, 4, t_p), lambda i, j: (i, 0, j)),
                pl.BlockSpec((1, 4, t_p), lambda i, j: (i, 0, j)),
            ],
            out_specs=pl.BlockSpec((1, c, t_p), lambda i, j: (i, 0, j)),
        ),
        compiler_params=pltpu.CompilerParams(
            dimension_semantics=("parallel", "parallel")),
    )(source.astype(jnp.float32), ydata, xdata)
    return out[:, :, :P].reshape(n, c, H, W)


def _reflect_dct2(idx, size):
    m = jnp.mod(idx, 2 * size)
    return jnp.where(m >= size, 2 * size - 1 - m, m)


def bilinear_axis_data(grid, shape):
    """grid: (N,H,W,2) sampling coords -> per-axis corner data (N,4,P) x 2 (float32)."""
    H, W = shape
    n = grid.shape[0]
    P = H * W
    gy = grid[..., 0].reshape(n, P)
    gx = grid[..., 1].reshape(n, P)
    y0 = jnp.floor(gy)
    x0 = jnp.floor(gx)
    wy1, wx1 = gy - y0, gx - x0
    wy0, wx0 = 1.0 - wy1, 1.0 - wx1
    y0i, x0i = y0.astype(jnp.int32), x0.astype(jnp.int32)
    ry0, ry1 = _reflect_dct2(y0i, H), _reflect_dct2(y0i + 1, H)
    rx0, rx1 = _reflect_dct2(x0i, W), _reflect_dct2(x0i + 1, W)
    # TODO(synk): single per-sample in-bounds mask; verify against nitorch
    # GridPull(extrapolate=False) (per-corner masking) if exactness matters.
    inb = ((gy >= -0.5) & (gy <= H - 0.5) &
           (gx >= -0.5) & (gx <= W - 0.5)).astype(jnp.float32)
    f32 = jnp.float32
    ydata = jnp.stack([ry0.astype(f32), ry1.astype(f32), wy0, wy1], axis=1)
    xdata = jnp.stack([rx0.astype(f32), rx1.astype(f32), wx0 * inb, wx1 * inb], axis=1)
    return ydata.astype(f32), xdata.astype(f32)


# ---------------------------------------------------------------------------
# Affine glue (small (dim+1)x(dim+1) algebra) — plain JAX
# ---------------------------------------------------------------------------
def _homogeneous(Z, T):
    d = Z.shape[-1]
    top = jnp.concatenate([Z, T], axis=-1)
    bottom = jnp.zeros(Z.shape[:-2] + (1, d + 1), Z.dtype)
    bottom = bottom.at[..., 0, -1].set(1.0)
    return jnp.concatenate([top, bottom], axis=-2)


def affine_matmul(a, b):
    d = a.shape[-1] - 1
    Za, Ta = a[..., :d, :d], a[..., :d, -1:]
    Zb, Tb = b[..., :d, :d], b[..., :d, -1:]
    return _homogeneous(Za @ Zb, Za @ Tb + Ta)


def affine_inv(a):
    d = a.shape[-1] - 1
    Z, T = a[..., :d, :d], a[..., :d, -1:]
    Zi = jnp.linalg.inv(Z)
    return _homogeneous(Zi, -Zi @ T)


def affine_lmdiv(a, b):
    return affine_matmul(affine_inv(a), b)


def dense_to_affine_from_stats(stats12, spatial_shape, shift=True):
    """Assemble DenseToAffine.forward from the packed 12 voxel statistics."""
    n = stats12.shape[0]
    dim = len(spatial_shape)
    assert dim == 2
    # Reference sums the weights over the whole batch and only supports batch 1;
    # guard explicitly (per review).
    assert n == 1, "DenseToAffine reference semantics require batch size 1"
    Ayy, Ayx, Axx = stats12[:, 0], stats12[:, 1], stats12[:, 2]
    Cyy, Cyx, Cxy, Cxx = stats12[:, 3], stats12[:, 4], stats12[:, 5], stats12[:, 6]
    by, bx = stats12[:, 7], stats12[:, 8]
    ey, ex = stats12[:, 9], stats12[:, 10]
    s = stats12[:, 11]

    GG = jnp.stack([jnp.stack([Ayy, Ayx, by], axis=-1),
                    jnp.stack([Ayx, Axx, bx], axis=-1),
                    jnp.stack([by, bx, s], axis=-1)], axis=-2)
    GD = jnp.stack([jnp.stack([Cyy, Cyx, ey], axis=-1),
                    jnp.stack([Cxy, Cxx, ex], axis=-1),
                    jnp.stack([ey, ex, s], axis=-1)], axis=-2)

    aff = jnp.linalg.inv(GG) @ GD
    eye_mod = jnp.eye(dim + 1, dtype=jnp.float32).at[-1, -1].set(0.0)
    aff = jnp.swapaxes(aff, -1, -2) + eye_mod

    if shift:
        # NOTE: reference does `affine_shift[:dim,-1].sub(1).div(2).neg()` which is
        # NOT in-place (result discarded), so the shift column stays = shape.
        shift_mat = jnp.eye(dim + 1, dtype=jnp.float32)
        shift_mat = shift_mat.at[:dim, -1].set(
            jnp.asarray(spatial_shape, jnp.float32))
        shift_mat = jnp.broadcast_to(shift_mat, (n, dim + 1, dim + 1))
        aff = affine_matmul(aff, shift_mat)
        aff = affine_lmdiv(shift_mat, aff)
    return aff


# TODO(synk): nitorch AffineClassicInverse/AffineClassic ('CSO' similitude) not
# provided; using the standard 2-D similitude decomposition (t, angle, zoom).
def affine_classic_inverse_cso_2d(aff):
    L = aff[..., :2, :2]
    t = aff[..., :2, -1]
    theta = jnp.arctan2(L[..., 1, 0] - L[..., 0, 1], L[..., 0, 0] + L[..., 1, 1])
    det = L[..., 0, 0] * L[..., 1, 1] - L[..., 0, 1] * L[..., 1, 0]
    zoom = jnp.sqrt(jnp.abs(det))
    return jnp.concatenate([t, theta[..., None], zoom[..., None]], axis=-1)  # (N,4)


def affine_classic_cso_2d(prm):
    t = prm[..., :2]
    theta = prm[..., 2]
    z = prm[..., 3]
    c, s = jnp.cos(theta), jnp.sin(theta)
    row0 = jnp.stack([c, -s], axis=-1)
    row1 = jnp.stack([s, c], axis=-1)
    L = z[..., None, None] * jnp.stack([row0, row1], axis=-2)
    return _homogeneous(L, t[..., None])


# TODO(synk): nitorch AffineGrid not provided; standard voxel grid with the
# rotation center shifted to the FOV center ((shape-1)/2).
def affine_grid_shifted(aff, shape):
    dim = len(shape)
    axes = [jnp.arange(s, dtype=jnp.float32) for s in shape]
    coords = jnp.stack(jnp.meshgrid(*axes, indexing="ij"), axis=-1)   # (H,W,dim)
    c = (jnp.asarray(shape, jnp.float32) - 1.0) / 2.0
    L = aff[:, :dim, :dim]
    t = aff[:, :dim, -1]
    xc = coords - c
    return jnp.einsum("nij,hwj->nhwi", L, xc) + t[:, None, None, :] + c  # (N,H,W,dim)


# ---------------------------------------------------------------------------
# Full forward: AffineMorphFromDense.forward(source, target)
# ---------------------------------------------------------------------------
def affine_morph_from_dense_forward(source, target, params, *, tile_rows=64,
                                    tile_pixels=2048,
                                    pull_matmul_dtype=jnp.bfloat16):
    N, C, H, W = source.shape

    source_and_target = jnp.concatenate([source, target], axis=1)        # (N,2C,H,W)
    # Fused UNet stem + LeakyReLU + |weights| + DenseToAffine statistics: the dense
    # displacement field never touches HBM.
    stats = conv_stats(source_and_target, params["conv_w"], params["conv_b"],
                       tile_rows=tile_rows)                               # (N,12)
    affine = dense_to_affine_from_stats(stats, (H, W), shift=True)        # (N,3,3)
    prm = affine_classic_inverse_cso_2d(affine)                           # (N,4)
    affine = affine_classic_cso_2d(prm)                                   # (N,3,3)
    grid = affine_grid_shifted(affine, (H, W))                            # (N,H,W,2)

    ydata, xdata = bilinear_axis_data(grid, (H, W))                       # (N,4,P)
    deformed = grid_pull_bilinear(source, ydata, xdata,
                                  tile_pixels=tile_pixels,
                                  matmul_dtype=pull_matmul_dtype)         # (N,C,H,W)
    return deformed, prm


if __name__ == "__main__":
    key = jax.random.PRNGKey(0)
    k1, k2, k3, k4 = jax.random.split(key, 4)
    N, C, H, W = 1, 1, 32, 32   # DenseToAffine reference semantics assume batch=1
    dim = 2
    source = jax.random.normal(k1, (N, C, H, W), jnp.float32)
    target = jax.random.normal(k2, (N, C, H, W), jnp.float32)
    params = {
        "conv_w": 0.2 * jax.random.normal(k3, (dim + 1, 2 * C, 3, 3), jnp.float32),
        "conv_b": 0.05 * jax.random.normal(k4, (dim + 1,), jnp.float32),
    }

    # Self-check of the fused conv+stats kernel (f32 math) against a pure-JAX
    # reference; small tiles so the multi-row-tile path is exercised at toy sizes.
    x_cat = jnp.concatenate([source, target], axis=1)
    stats_pallas = conv_stats(x_cat, params["conv_w"], params["conv_b"], tile_rows=8)
    stats_ref = _conv_stats_ref(x_cat, params["conv_w"], params["conv_b"])
    err = jnp.max(jnp.abs(stats_pallas - stats_ref))
    tol = 1e-3 * (1.0 + jnp.max(jnp.abs(stats_ref)))
    assert bool(err <= tol), f"conv+stats mismatch: {err} > {tol}"

    fwd = jax.jit(functools.partial(affine_morph_from_dense_forward,
                                    tile_rows=8, tile_pixels=256))
    deformed, prm = fwd(source, target, params)
    jax.block_until_ready((deformed, prm))
    assert deformed.shape == (N, C, H, W) and prm.shape == (N, 4)
    assert bool(jnp.all(jnp.isfinite(deformed))) and bool(jnp.all(jnp.isfinite(prm)))
    print("KERNEL_OK")
</pallas_src>

<mosaic_0001>
module attributes {stable_mosaic.version = 11 : i64} {
  func.func @_conv_stats_kernel(%arg0: i32, %arg1: i32, %arg2: memref<1x2x34x34xf32, #tpu.memory_space<vmem>>, %arg3: memref<54xf32, #tpu.memory_space<smem>>, %arg4: memref<3xf32, #tpu.memory_space<smem>>, %arg5: memref<1x1x8x128xf32, #tpu.memory_space<vmem>>) attributes {dimension_semantics = [#tpu.dimension_semantics<parallel>, #tpu.dimension_semantics<parallel>], iteration_bounds = array<i64: 1, 4>, scalar_prefetch = 0 : i64, scratch_operands = 0 : i64, tpu.core_type = #tpu.core_type<tc>, window_params = [{transform_indices = @transform_0, window_bounds = array<i64: 1, 2, 34, 34>}, {transform_indices = @transform_1, window_bounds = array<i64: 54>}, {transform_indices = @transform_2, window_bounds = array<i64: 3>}, {transform_indices = @transform_3, window_bounds = array<i64: 1, 1, 8, 128>}]} {
    %c8_i32 = arith.constant 8 : i32
    %0 = arith.muli %arg1, %c8_i32 : i32
    %1 = tpu.assume_multiple %0, 8 : i32
    %c0_i32 = arith.constant 0 : i32
    %2 = arith.addi %1, %c0_i32 : i32
    %c0 = arith.constant 0 : index
    %c0_0 = arith.constant 0 : index
    %3 = arith.index_cast %2 : i32 to index
    %c0_1 = arith.constant 0 : index
    %4 = vector.load %arg2[%c0, %c0_0, %3, %c0_1] : memref<1x2x34x34xf32, #tpu.memory_space<vmem>>, vector<1x1x8x32xf32>
    %5 = vector.shape_cast %4 : vector<1x1x8x32xf32> to vector<8x32xf32>
    %c0_i32_2 = arith.constant 0 : i32
    %6 = arith.addi %1, %c0_i32_2 : i32
    %c0_3 = arith.constant 0 : index
    %c0_4 = arith.constant 0 : index
    %7 = arith.index_cast %6 : i32 to index
    %c1 = arith.constant 1 : index
    %8 = vector.load %arg2[%c0_3, %c0_4, %7, %c1] : memref<1x2x34x34xf32, #tpu.memory_space<vmem>>, vector<1x1x8x32xf32>
    %9 = vector.shape_cast %8 : vector<1x1x8x32xf32> to vector<8x32xf32>
    %c0_i32_5 = arith.constant 0 : i32
    %10 = arith.addi %1, %c0_i32_5 : i32
    %c0_6 = arith.constant 0 : index
    %c0_7 = arith.constant 0 : index
    %11 = arith.index_cast %10 : i32 to index
    %c2 = arith.constant 2 : index
    %12 = vector.load %arg2[%c0_6, %c0_7, %11, %c2] : memref<1x2x34x34xf32, #tpu.memory_space<vmem>>, vector<1x1x8x32xf32>
    %13 = vector.shape_cast %12 : vector<1x1x8x32xf32> to vector<8x32xf32>
    %c1_i32 = arith.constant 1 : i32
    %14 = arith.addi %1, %c1_i32 : i32
    %c0_8 = arith.constant 0 : index
    %c0_9 = arith.constant 0 : index
    %15 = arith.index_cast %14 : i32 to index
    %c0_10 = arith.constant 0 : index
    %16 = vector.load %arg2[%c0_8, %c0_9, %15, %c0_10] : memref<1x2x34x34xf32, #tpu.memory_space<vmem>>, vector<1x1x8x32xf32>
    %17 = vector.shape_cast %16 : vector<1x1x8x32xf32> to vector<8x32xf32>
    %c1_i32_11 = arith.constant 1 : i32
    %18 = arith.addi %1, %c1_i32_11 : i32
    %c0_12 = arith.constant 0 : index
    %c0_13 = arith.constant 0 : index
    %19 = arith.index_cast %18 : i32 to index
    %c1_14 = arith.constant 1 : index
    %20 = vector.load %arg2[%c0_12, %c0_13, %19, %c1_14] : memref<1x2x34x34xf32, #tpu.memory_space<vmem>>, vector<1x1x8x32xf32>
    %21 = vector.shape_cast %20 : vector<1x1x8x32xf32> to vector<8x32xf32>
    %c1_i32_15 = arith.constant 1 : i32
    %22 = arith.addi %1, %c1_i32_15 : i32
    %c0_16 = arith.constant 0 : index
    %c0_17 = arith.constant 0 : index
    %23 = arith.index_cast %22 : i32 to index
    %c2_18 = arith.constant 2 : index
    %24 = vector.load %arg2[%c0_16, %c0_17, %23, %c2_18] : memref<1x2x34x34xf32, #tpu.memory_space<vmem>>, vector<1x1x8x32xf32>
    %25 = vector.shape_cast %24 : vector<1x1x8x32xf32> to vector<8x32xf32>
    %c2_i32 = arith.constant 2 : i32
    %26 = arith.addi %1, %c2_i32 : i32
    %c0_19 = arith.constant 0 : index
    %c0_20 = arith.constant 0 : index
    %27 = arith.index_cast %26 : i32 to index
    %c0_21 = arith.constant 0 : index
    %28 = vector.load %arg2[%c0_19, %c0_20, %27, %c0_21] : memref<1x2x34x34xf32, #tpu.memory_space<vmem>>, vector<1x1x8x32xf32>
    %29 = vector.shape_cast %28 : vector<1x1x8x32xf32> to vector<8x32xf32>
    %c2_i32_22 = arith.constant 2 : i32
    %30 = arith.addi %1, %c2_i32_22 : i32
    %c0_23 = arith.constant 0 : index
    %c0_24 = arith.constant 0 : index
    %31 = arith.index_cast %30 : i32 to index
    %c1_25 = arith.constant 1 : index
    %32 = vector.load %arg2[%c0_23, %c0_24, %31, %c1_25] : memref<1x2x34x34xf32, #tpu.memory_space<vmem>>, vector<1x1x8x32xf32>
    %33 = vector.shape_cast %32 : vector<1x1x8x32xf32> to vector<8x32xf32>
    %c2_i32_26 = arith.constant 2 : i32
    %34 = arith.addi %1, %c2_i32_26 : i32
    %c0_27 = arith.constant 0 : index
    %c0_28 = arith.constant 0 : index
    %35 = arith.index_cast %34 : i32 to index
    %c2_29 = arith.constant 2 : index
    %36 = vector.load %arg2[%c0_27, %c0_28, %35, %c2_29] : memref<1x2x34x34xf32, #tpu.memory_space<vmem>>, vector<1x1x8x32xf32>
    %37 = vector.shape_cast %36 : vector<1x1x8x32xf32> to vector<8x32xf32>
    %c0_i32_30 = arith.constant 0 : i32
    %38 = arith.addi %1, %c0_i32_30 : i32
    %c0_31 = arith.constant 0 : index
    %c1_32 = arith.constant 1 : index
    %39 = arith.index_cast %38 : i32 to index
    %c0_33 = arith.constant 0 : index
    %40 = vector.load %arg2[%c0_31, %c1_32, %39, %c0_33] : memref<1x2x34x34xf32, #tpu.memory_space<vmem>>, vector<1x1x8x32xf32>
    %41 = vector.shape_cast %40 : vector<1x1x8x32xf32> to vector<8x32xf32>
    %c0_i32_34 = arith.constant 0 : i32
    %42 = arith.addi %1, %c0_i32_34 : i32
    %c0_35 = arith.constant 0 : index
    %c1_36 = arith.constant 1 : index
    %43 = arith.index_cast %42 : i32 to index
    %c1_37 = arith.constant 1 : index
    %44 = vector.load %arg2[%c0_35, %c1_36, %43, %c1_37] : memref<1x2x34x34xf32, #tpu.memory_space<vmem>>, vector<1x1x8x32xf32>
    %45 = vector.shape_cast %44 : vector<1x1x8x32xf32> to vector<8x32xf32>
    %c0_i32_38 = arith.constant 0 : i32
    %46 = arith.addi %1, %c0_i32_38 : i32
    %c0_39 = arith.constant 0 : index
    %c1_40 = arith.constant 1 : index
    %47 = arith.index_cast %46 : i32 to index
    %c2_41 = arith.constant 2 : index
    %48 = vector.load %arg2[%c0_39, %c1_40, %47, %c2_41] : memref<1x2x34x34xf32, #tpu.memory_space<vmem>>, vector<1x1x8x32xf32>
    %49 = vector.shape_cast %48 : vector<1x1x8x32xf32> to vector<8x32xf32>
    %c1_i32_42 = arith.constant 1 : i32
    %50 = arith.addi %1, %c1_i32_42 : i32
    %c0_43 = arith.constant 0 : index
    %c1_44 = arith.constant 1 : index
    %51 = arith.index_cast %50 : i32 to index
    %c0_45 = arith.constant 0 : index
    %52 = vector.load %arg2[%c0_43, %c1_44, %51, %c0_45] : memref<1x2x34x34xf32, #tpu.memory_space<vmem>>, vector<1x1x8x32xf32>
    %53 = vector.shape_cast %52 : vector<1x1x8x32xf32> to vector<8x32xf32>
    %c1_i32_46 = arith.constant 1 : i32
    %54 = arith.addi %1, %c1_i32_46 : i32
    %c0_47 = arith.constant 0 : index
    %c1_48 = arith.constant 1 : index
    %55 = arith.index_cast %54 : i32 to index
    %c1_49 = arith.constant 1 : index
    %56 = vector.load %arg2[%c0_47, %c1_48, %55, %c1_49] : memref<1x2x34x34xf32, #tpu.memory_space<vmem>>, vector<1x1x8x32xf32>
    %57 = vector.shape_cast %56 : vector<1x1x8x32xf32> to vector<8x32xf32>
    %c1_i32_50 = arith.constant 1 : i32
    %58 = arith.addi %1, %c1_i32_50 : i32
    %c0_51 = arith.constant 0 : index
    %c1_52 = arith.constant 1 : index
    %59 = arith.index_cast %58 : i32 to index
    %c2_53 = arith.constant 2 : index
    %60 = vector.load %arg2[%c0_51, %c1_52, %59, %c2_53] : memref<1x2x34x34xf32, #tpu.memory_space<vmem>>, vector<1x1x8x32xf32>
    %61 = vector.shape_cast %60 : vector<1x1x8x32xf32> to vector<8x32xf32>
    %c2_i32_54 = arith.constant 2 : i32
    %62 = arith.addi %1, %c2_i32_54 : i32
    %c0_55 = arith.constant 0 : index
    %c1_56 = arith.constant 1 : index
    %63 = arith.index_cast %62 : i32 to index
    %c0_57 = arith.constant 0 : index
    %64 = vector.load %arg2[%c0_55, %c1_56, %63, %c0_57] : memref<1x2x34x34xf32, #tpu.memory_space<vmem>>, vector<1x1x8x32xf32>
    %65 = vector.shape_cast %64 : vector<1x1x8x32xf32> to vector<8x32xf32>
    %c2_i32_58 = arith.constant 2 : i32
    %66 = arith.addi %1, %c2_i32_58 : i32
    %c0_59 = arith.constant 0 : index
    %c1_60 = arith.constant 1 : index
    %67 = arith.index_cast %66 : i32 to index
    %c1_61 = arith.constant 1 : index
    %68 = vector.load %arg2[%c0_59, %c1_60, %67, %c1_61] : memref<1x2x34x34xf32, #tpu.memory_space<vmem>>, vector<1x1x8x32xf32>
    %69 = vector.shape_cast %68 : vector<1x1x8x32xf32> to vector<8x32xf32>
    %c2_i32_62 = arith.constant 2 : i32
    %70 = arith.addi %1, %c2_i32_62 : i32
    %c0_63 = arith.constant 0 : index
    %c1_64 = arith.constant 1 : index
    %71 = arith.index_cast %70 : i32 to index
    %c2_65 = arith.constant 2 : index
    %72 = vector.load %arg2[%c0_63, %c1_64, %71, %c2_65] : memref<1x2x34x34xf32, #tpu.memory_space<vmem>>, vector<1x1x8x32xf32>
    %73 = vector.shape_cast %72 : vector<1x1x8x32xf32> to vector<8x32xf32>
    %c0_66 = arith.constant 0 : index
    %74 = memref.load %arg4[%c0_66] : memref<3xf32, #tpu.memory_space<smem>>
    %75 = vector.broadcast %74 : f32 to vector<8x32xf32>
    %c0_67 = arith.constant 0 : index
    %76 = memref.load %arg3[%c0_67] : memref<54xf32, #tpu.memory_space<smem>>
    %77 = vector.broadcast %76 : f32 to vector<8x32xf32>
    %78 = arith.mulf %77, %5 : vector<8x32xf32>
    %79 = arith.addf %75, %78 : vector<8x32xf32>
    %c1_68 = arith.constant 1 : index
    %80 = memref.load %arg3[%c1_68] : memref<54xf32, #tpu.memory_space<smem>>
    %81 = vector.broadcast %80 : f32 to vector<8x32xf32>
    %82 = arith.mulf %81, %9 : vector<8x32xf32>
    %83 = arith.addf %79, %82 : vector<8x32xf32>
    %c2_69 = arith.constant 2 : index
    %84 = memref.load %arg3[%c2_69] : memref<54xf32, #tpu.memory_space<smem>>
    %85 = vector.broadcast %84 : f32 to vector<8x32xf32>
    %86 = arith.mulf %85, %13 : vector<8x32xf32>
    %87 = arith.addf %83, %86 : vector<8x32xf32>
    %c3 = arith.constant 3 : index
    %88 = memref.load %arg3[%c3] : memref<54xf32, #tpu.memory_space<smem>>
    %89 = vector.broadcast %88 : f32 to vector<8x32xf32>
    %90 = arith.mulf %89, %17 : vector<8x32xf32>
    %91 = arith.addf %87, %90 : vector<8x32xf32>
    %c4 = arith.constant 4 : index
    %92 = memref.load %arg3[%c4] : memref<54xf32, #tpu.memory_space<smem>>
    %93 = vector.broadcast %92 : f32 to vector<8x32xf32>
    %94 = arith.mulf %93, %21 : vector<8x32xf32>
    %95 = arith.addf %91, %94 : vector<8x32xf32>
    %c5 = arith.constant 5 : index
    %96 = memref.load %arg3[%c5] : memref<54xf32, #tpu.memory_space<smem>>
    %97 = vector.broadcast %96 : f32 to vector<8x32xf32>
    %98 = arith.mulf %97, %25 : vector<8x32xf32>
    %99 = arith.addf %95, %98 : vector<8x32xf32>
    %c6 = arith.constant 6 : index
    %100 = memref.load %arg3[%c6] : memref<54xf32, #tpu.memory_space<smem>>
    %101 = vector.broadcast %100 : f32 to vector<8x32xf32>
    %102 = arith.mulf %101, %29 : vector<8x32xf32>
    %103 = arith.addf %99, %102 : vector<8x32xf32>
    %c7 = arith.constant 7 : index
    %104 = memref.load %arg3[%c7] : memref<54xf32, #tpu.memory_space<smem>>
    %105 = vector.broadcast %104 : f32 to vector<8x32xf32>
    %106 = arith.mulf %105, %33 : vector<8x32xf32>
    %107 = arith.addf %103, %106 : vector<8x32xf32>
    %c8 = arith.constant 8 : index
    %108 = memref.load %arg3[%c8] : memref<54xf32, #tpu.memory_space<smem>>
    %109 = vector.broadcast %108 : f32 to vector<8x32xf32>
    %110 = arith.mulf %109, %37 : vector<8x32xf32>
    %111 = arith.addf %107, %110 : vector<8x32xf32>
    %c9 = arith.constant 9 : index
    %112 = memref.load %arg3[%c9] : memref<54xf32, #tpu.memory_space<smem>>
    %113 = vector.broadcast %112 : f32 to vector<8x32xf32>
    %114 = arith.mulf %113, %41 : vector<8x32xf32>
    %115 = arith.addf %111, %114 : vector<8x32xf32>
    %c10 = arith.constant 10 : index
    %116 = memref.load %arg3[%c10] : memref<54xf32, #tpu.memory_space<smem>>
    %117 = vector.broadcast %116 : f32 to vector<8x32xf32>
    %118 = arith.mulf %117, %45 : vector<8x32xf32>
    %119 = arith.addf %115, %118 : vector<8x32xf32>
    %c11 = arith.constant 11 : index
    %120 = memref.load %arg3[%c11] : memref<54xf32, #tpu.memory_space<smem>>
    %121 = vector.broadcast %120 : f32 to vector<8x32xf32>
    %122 = arith.mulf %121, %49 : vector<8x32xf32>
    %123 = arith.addf %119, %122 : vector<8x32xf32>
    %c12 = arith.constant 12 : index
    %124 = memref.load %arg3[%c12] : memref<54xf32, #tpu.memory_space<smem>>
    %125 = vector.broadcast %124 : f32 to vector<8x32xf32>
    %126 = arith.mulf %125, %53 : vector<8x32xf32>
    %127 = arith.addf %123, %126 : vector<8x32xf32>
    %c13 = arith.constant 13 : index
    %128 = memref.load %arg3[%c13] : memref<54xf32, #tpu.memory_space<smem>>
    %129 = vector.broadcast %128 : f32 to vector<8x32xf32>
    %130 = arith.mulf %129, %57 : vector<8x32xf32>
    %131 = arith.addf %127, %130 : vector<8x32xf32>
    %c14 = arith.constant 14 : index
    %132 = memref.load %arg3[%c14] : memref<54xf32, #tpu.memory_space<smem>>
    %133 = vector.broadcast %132 : f32 to vector<8x32xf32>
    %134 = arith.mulf %133, %61 : vector<8x32xf32>
    %135 = arith.addf %131, %134 : vector<8x32xf32>
    %c15 = arith.constant 15 : index
    %136 = memref.load %arg3[%c15] : memref<54xf32, #tpu.memory_space<smem>>
    %137 = vector.broadcast %136 : f32 to vector<8x32xf32>
    %138 = arith.mulf %137, %65 : vector<8x32xf32>
    %139 = arith.addf %135, %138 : vector<8x32xf32>
    %c16 = arith.constant 16 : index
    %140 = memref.load %arg3[%c16] : memref<54xf32, #tpu.memory_space<smem>>
    %141 = vector.broadcast %140 : f32 to vector<8x32xf32>
    %142 = arith.mulf %141, %69 : vector<8x32xf32>
    %143 = arith.addf %139, %142 : vector<8x32xf32>
    %c17 = arith.constant 17 : index
    %144 = memref.load %arg3[%c17] : memref<54xf32, #tpu.memory_space<smem>>
    %145 = vector.broadcast %144 : f32 to vector<8x32xf32>
    %146 = arith.mulf %145, %73 : vector<8x32xf32>
    %147 = arith.addf %143, %146 : vector<8x32xf32>
    %cst = arith.constant 2.000000e-01 : f32
    %148 = vector.broadcast %cst : f32 to vector<8x32xf32>
    %149 = arith.mulf %148, %147 : vector<8x32xf32>
    %150 = arith.maximumf %147, %149 : vector<8x32xf32>
    %c1_70 = arith.constant 1 : index
    %151 = memref.load %arg4[%c1_70] : memref<3xf32, #tpu.memory_space<smem>>
    %152 = vector.broadcast %151 : f32 to vector<8x32xf32>
    %c18 = arith.constant 18 : index
    %153 = memref.load %arg3[%c18] : memref<54xf32, #tpu.memory_space<smem>>
    %154 = vector.broadcast %153 : f32 to vector<8x32xf32>
    %155 = arith.mulf %154, %5 : vector<8x32xf32>
    %156 = arith.addf %152, %155 : vector<8x32xf32>
    %c19 = arith.constant 19 : index
    %157 = memref.load %arg3[%c19] : memref<54xf32, #tpu.memory_space<smem>>
    %158 = vector.broadcast %157 : f32 to vector<8x32xf32>
    %159 = arith.mulf %158, %9 : vector<8x32xf32>
    %160 = arith.addf %156, %159 : vector<8x32xf32>
    %c20 = arith.constant 20 : index
    %161 = memref.load %arg3[%c20] : memref<54xf32, #tpu.memory_space<smem>>
    %162 = vector.broadcast %161 : f32 to vector<8x32xf32>
    %163 = arith.mulf %162, %13 : vector<8x32xf32>
    %164 = arith.addf %160, %163 : vector<8x32xf32>
    %c21 = arith.constant 21 : index
    %165 = memref.load %arg3[%c21] : memref<54xf32, #tpu.memory_space<smem>>
    %166 = vector.broadcast %165 : f32 to vector<8x32xf32>
    %167 = arith.mulf %166, %17 : vector<8x32xf32>
    %168 = arith.addf %164, %167 : vector<8x32xf32>
    %c22 = arith.constant 22 : index
    %169 = memref.load %arg3[%c22] : memref<54xf32, #tpu.memory_space<smem>>
    %170 = vector.broadcast %169 : f32 to vector<8x32xf32>
    %171 = arith.mulf %170, %21 : vector<8x32xf32>
    %172 = arith.addf %168, %171 : vector<8x32xf32>
    %c23 = arith.constant 23 : index
    %173 = memref.load %arg3[%c23] : memref<54xf32, #tpu.memory_space<smem>>
    %174 = vector.broadcast %173 : f32 to vector<8x32xf32>
    %175 = arith.mulf %174, %25 : vector<8x32xf32>
    %176 = arith.addf %172, %175 : vector<8x32xf32>
    %c24 = arith.constant 24 : index
    %177 = memref.load %arg3[%c24] : memref<54xf32, #tpu.memory_space<smem>>
    %178 = vector.broadcast %177 : f32 to vector<8x32xf32>
    %179 = arith.mulf %178, %29 : vector<8x32xf32>
    %180 = arith.addf %176, %179 : vector<8x32xf32>
    %c25 = arith.constant 25 : index
    %181 = memref.load %arg3[%c25] : memref<54xf32, #tpu.memory_space<smem>>
    %182 = vector.broadcast %181 : f32 to vector<8x32xf32>
    %183 = arith.mulf %182, %33 : vector<8x32xf32>
    %184 = arith.addf %180, %183 : vector<8x32xf32>
    %c26 = arith.constant 26 : index
    %185 = memref.load %arg3[%c26] : memref<54xf32, #tpu.memory_space<smem>>
    %186 = vector.broadcast %185 : f32 to vector<8x32xf32>
    %187 = arith.mulf %186, %37 : vector<8x32xf32>
    %188 = arith.addf %184, %187 : vector<8x32xf32>
    %c27 = arith.constant 27 : index
    %189 = memref.load %arg3[%c27] : memref<54xf32, #tpu.memory_space<smem>>
    %190 = vector.broadcast %189 : f32 to vector<8x32xf32>
    %191 = arith.mulf %190, %41 : vector<8x32xf32>
    %192 = arith.addf %188, %191 : vector<8x32xf32>
    %c28 = arith.constant 28 : index
    %193 = memref.load %arg3[%c28] : memref<54xf32, #tpu.memory_space<smem>>
    %194 = vector.broadcast %193 : f32 to vector<8x32xf32>
    %195 = arith.mulf %194, %45 : vector<8x32xf32>
    %196 = arith.addf %192, %195 : vector<8x32xf32>
    %c29 = arith.constant 29 : index
    %197 = memref.load %arg3[%c29] : memref<54xf32, #tpu.memory_space<smem>>
    %198 = vector.broadcast %197 : f32 to vector<8x32xf32>
    %199 = arith.mulf %198, %49 : vector<8x32xf32>
    %200 = arith.addf %196, %199 : vector<8x32xf32>
    %c30 = arith.constant 30 : index
    %201 = memref.load %arg3[%c30] : memref<54xf32, #tpu.memory_space<smem>>
    %202 = vector.broadcast %201 : f32 to vector<8x32xf32>
    %203 = arith.mulf %202, %53 : vector<8x32xf32>
    %204 = arith.addf %200, %203 : vector<8x32xf32>
    %c31 = arith.constant 31 : index
    %205 = memref.load %arg3[%c31] : memref<54xf32, #tpu.memory_space<smem>>
    %206 = vector.broadcast %205 : f32 to vector<8x32xf32>
    %207 = arith.mulf %206, %57 : vector<8x32xf32>
    %208 = arith.addf %204, %207 : vector<8x32xf32>
    %c32 = arith.constant 32 : index
    %209 = memref.load %arg3[%c32] : memref<54xf32, #tpu.memory_space<smem>>
    %210 = vector.broadcast %209 : f32 to vector<8x32xf32>
    %211 = arith.mulf %210, %61 : vector<8x32xf32>
    %212 = arith.addf %208, %211 : vector<8x32xf32>
    %c33 = arith.constant 33 : index
    %213 = memref.load %arg3[%c33] : memref<54xf32, #tpu.memory_space<smem>>
    %214 = vector.broadcast %213 : f32 to vector<8x32xf32>
    %215 = arith.mulf %214, %65 : vector<8x32xf32>
    %216 = arith.addf %212, %215 : vector<8x32xf32>
    %c34 = arith.constant 34 : index
    %217 = memref.load %arg3[%c34] : memref<54xf32, #tpu.memory_space<smem>>
    %218 = vector.broadcast %217 : f32 to vector<8x32xf32>
    %219 = arith.mulf %218, %69 : vector<8x32xf32>
    %220 = arith.addf %216, %219 : vector<8x32xf32>
    %c35 = arith.constant 35 : index
    %221 = memref.load %arg3[%c35] : memref<54xf32, #tpu.memory_space<smem>>
    %222 = vector.broadcast %221 : f32 to vector<8x32xf32>
    %223 = arith.mulf %222, %73 : vector<8x32xf32>
    %224 = arith.addf %220, %223 : vector<8x32xf32>
    %cst_71 = arith.constant 2.000000e-01 : f32
    %225 = vector.broadcast %cst_71 : f32 to vector<8x32xf32>
    %226 = arith.mulf %225, %224 : vector<8x32xf32>
    %227 = arith.maximumf %224, %226 : vector<8x32xf32>
    %c2_72 = arith.constant 2 : index
    %228 = memref.load %arg4[%c2_72] : memref<3xf32, #tpu.memory_space<smem>>
    %229 = vector.broadcast %228 : f32 to vector<8x32xf32>
    %c36 = arith.constant 36 : index
    %230 = memref.load %arg3[%c36] : memref<54xf32, #tpu.memory_space<smem>>
    %231 = vector.broadcast %230 : f32 to vector<8x32xf32>
    %232 = arith.mulf %231, %5 : vector<8x32xf32>
    %233 = arith.addf %229, %232 : vector<8x32xf32>
    %c37 = arith.constant 37 : index
    %234 = memref.load %arg3[%c37] : memref<54xf32, #tpu.memory_space<smem>>
    %235 = vector.broadcast %234 : f32 to vector<8x32xf32>
    %236 = arith.mulf %235, %9 : vector<8x32xf32>
    %237 = arith.addf %233, %236 : vector<8x32xf32>
    %c38 = arith.constant 38 : index
    %238 = memref.load %arg3[%c38] : memref<54xf32, #tpu.memory_space<smem>>
    %239 = vector.broadcast %238 : f32 to vector<8x32xf32>
    %240 = arith.mulf %239, %13 : vector<8x32xf32>
    %241 = arith.addf %237, %240 : vector<8x32xf32>
    %c39 = arith.constant 39 : index
    %242 = memref.load %arg3[%c39] : memref<54xf32, #tpu.memory_space<smem>>
    %243 = vector.broadcast %242 : f32 to vector<8x32xf32>
    %244 = arith.mulf %243, %17 : vector<8x32xf32>
    %245 = arith.addf %241, %244 : vector<8x32xf32>
    %c40 = arith.constant 40 : index
    %246 = memref.load %arg3[%c40] : memref<54xf32, #tpu.memory_space<smem>>
    %247 = vector.broadcast %246 : f32 to vector<8x32xf32>
    %248 = arith.mulf %247, %21 : vector<8x32xf32>
    %249 = arith.addf %245, %248 : vector<8x32xf32>
    %c41 = arith.constant 41 : index
    %250 = memref.load %arg3[%c41] : memref<54xf32, #tpu.memory_space<smem>>
    %251 = vector.broadcast %250 : f32 to vector<8x32xf32>
    %252 = arith.mulf %251, %25 : vector<8x32xf32>
    %253 = arith.addf %249, %252 : vector<8x32xf32>
    %c42 = arith.constant 42 : index
    %254 = memref.load %arg3[%c42] : memref<54xf32, #tpu.memory_space<smem>>
    %255 = vector.broadcast %254 : f32 to vector<8x32xf32>
    %256 = arith.mulf %255, %29 : vector<8x32xf32>
    %257 = arith.addf %253, %256 : vector<8x32xf32>
    %c43 = arith.constant 43 : index
    %258 = memref.load %arg3[%c43] : memref<54xf32, #tpu.memory_space<smem>>
    %259 = vector.broadcast %258 : f32 to vector<8x32xf32>
    %260 = arith.mulf %259, %33 : vector<8x32xf32>
    %261 = arith.addf %257, %260 : vector<8x32xf32>
    %c44 = arith.constant 44 : index
    %262 = memref.load %arg3[%c44] : memref<54xf32, #tpu.memory_space<smem>>
    %263 = vector.broadcast %262 : f32 to vector<8x32xf32>
    %264 = arith.mulf %263, %37 : vector<8x32xf32>
    %265 = arith.addf %261, %264 : vector<8x32xf32>
    %c45 = arith.constant 45 : index
    %266 = memref.load %arg3[%c45] : memref<54xf32, #tpu.memory_space<smem>>
    %267 = vector.broadcast %266 : f32 to vector<8x32xf32>
    %268 = arith.mulf %267, %41 : vector<8x32xf32>
    %269 = arith.addf %265, %268 : vector<8x32xf32>
    %c46 = arith.constant 46 : index
    %270 = memref.load %arg3[%c46] : memref<54xf32, #tpu.memory_space<smem>>
    %271 = vector.broadcast %270 : f32 to vector<8x32xf32>
    %272 = arith.mulf %271, %45 : vector<8x32xf32>
    %273 = arith.addf %269, %272 : vector<8x32xf32>
    %c47 = arith.constant 47 : index
    %274 = memref.load %arg3[%c47] : memref<54xf32, #tpu.memory_space<smem>>
    %275 = vector.broadcast %274 : f32 to vector<8x32xf32>
    %276 = arith.mulf %275, %49 : vector<8x32xf32>
    %277 = arith.addf %273, %276 : vector<8x32xf32>
    %c48 = arith.constant 48 : index
    %278 = memref.load %arg3[%c48] : memref<54xf32, #tpu.memory_space<smem>>
    %279 = vector.broadcast %278 : f32 to vector<8x32xf32>
    %280 = arith.mulf %279, %53 : vector<8x32xf32>
    %281 = arith.addf %277, %280 : vector<8x32xf32>
    %c49 = arith.constant 49 : index
    %282 = memref.load %arg3[%c49] : memref<54xf32, #tpu.memory_space<smem>>
    %283 = vector.broadcast %282 : f32 to vector<8x32xf32>
    %284 = arith.mulf %283, %57 : vector<8x32xf32>
    %285 = arith.addf %281, %284 : vector<8x32xf32>
    %c50 = arith.constant 50 : index
    %286 = memref.load %arg3[%c50] : memref<54xf32, #tpu.memory_space<smem>>
    %287 = vector.broadcast %286 : f32 to vector<8x32xf32>
    %288 = arith.mulf %287, %61 : vector<8x32xf32>
    %289 = arith.addf %285, %288 : vector<8x32xf32>
    %c51 = arith.constant 51 : index
    %290 = memref.load %arg3[%c51] : memref<54xf32, #tpu.memory_space<smem>>
    %291 = vector.broadcast %290 : f32 to vector<8x32xf32>
    %292 = arith.mulf %291, %65 : vector<8x32xf32>
    %293 = arith.addf %289, %292 : vector<8x32xf32>
    %c52 = arith.constant 52 : index
    %294 = memref.load %arg3[%c52] : memref<54xf32, #tpu.memory_space<smem>>
    %295 = vector.broadcast %294 : f32 to vector<8x32xf32>
    %296 = arith.mulf %295, %69 : vector<8x32xf32>
    %297 = arith.addf %293, %296 : vector<8x32xf32>
    %c53 = arith.constant 53 : index
    %298 = memref.load %arg3[%c53] : memref<54xf32, #tpu.memory_space<smem>>
    %299 = vector.broadcast %298 : f32 to vector<8x32xf32>
    %300 = arith.mulf %299, %73 : vector<8x32xf32>
    %301 = arith.addf %297, %300 : vector<8x32xf32>
    %cst_73 = arith.constant 2.000000e-01 : f32
    %302 = vector.broadcast %cst_73 : f32 to vector<8x32xf32>
    %303 = arith.mulf %302, %301 : vector<8x32xf32>
    %304 = arith.maximumf %301, %303 : vector<8x32xf32>
    %305 = math.absf %304 : vector<8x32xf32>
    %306 = tpu.iota {dimensions = array<i32: 0>} : vector<8x32xi32>
    %307 = arith.sitofp %306 : vector<8x32xi32> to vector<8x32xf32>
    %308 = arith.sitofp %1 : i32 to f32
    %309 = vector.broadcast %308 : f32 to vector<8x32xf32>
    %310 = arith.addf %307, %309 : vector<8x32xf32>
    %311 = tpu.iota {dimensions = array<i32: 1>} : vector<8x32xi32>
    %312 = arith.sitofp %311 : vector<8x32xi32> to vector<8x32xf32>
    %313 = arith.mulf %305, %310 : vector<8x32xf32>
    %314 = arith.mulf %305, %312 : vector<8x32xf32>
    %315 = arith.mulf %313, %310 : vector<8x32xf32>
    %316 = vector.shape_cast %315 : vector<8x32xf32> to vector<1x8x32xf32>
    %cst_74 = arith.constant dense<0.000000e+00> : vector<1xf32>
    %317 = vector.multi_reduction <add>, %316, %cst_74 [1, 2] : vector<1x8x32xf32> to vector<1xf32>
    %318 = vector.shape_cast %317 : vector<1xf32> to vector<1x1x1xf32>
    %319 = vector.extract %318[0, 0, 0] : f32 from vector<1x1x1xf32>
    %320 = vector.broadcast %319 : f32 to vector<1x1xf32>
    %321 = arith.mulf %313, %312 : vector<8x32xf32>
    %322 = vector.shape_cast %321 : vector<8x32xf32> to vector<1x8x32xf32>
    %cst_75 = arith.constant dense<0.000000e+00> : vector<1xf32>
    %323 = vector.multi_reduction <add>, %322, %cst_75 [1, 2] : vector<1x8x32xf32> to vector<1xf32>
    %324 = vector.shape_cast %323 : vector<1xf32> to vector<1x1x1xf32>
    %325 = vector.extract %324[0, 0, 0] : f32 from vector<1x1x1xf32>
    %326 = vector.broadcast %325 : f32 to vector<1x1xf32>
    %327 = arith.mulf %314, %312 : vector<8x32xf32>
    %328 = vector.shape_cast %327 : vector<8x32xf32> to vector<1x8x32xf32>
    %cst_76 = arith.constant dense<0.000000e+00> : vector<1xf32>
    %329 = vector.multi_reduction <add>, %328, %cst_76 [1, 2] : vector<1x8x32xf32> to vector<1xf32>
    %330 = vector.shape_cast %329 : vector<1xf32> to vector<1x1x1xf32>
    %331 = vector.extract %330[0, 0, 0] : f32 from vector<1x1x1xf32>
    %332 = vector.broadcast %331 : f32 to vector<1x1xf32>
    %333 = arith.mulf %313, %150 : vector<8x32xf32>
    %334 = vector.shape_cast %333 : vector<8x32xf32> to vector<1x8x32xf32>
    %cst_77 = arith.constant dense<0.000000e+00> : vector<1xf32>
    %335 = vector.multi_reduction <add>, %334, %cst_77 [1, 2] : vector<1x8x32xf32> to vector<1xf32>
    %336 = vector.shape_cast %335 : vector<1xf32> to vector<1x1x1xf32>
    %337 = vector.extract %336[0, 0, 0] : f32 from vector<1x1x1xf32>
    %338 = vector.broadcast %337 : f32 to vector<1x1xf32>
    %339 = arith.mulf %313, %227 : vector<8x32xf32>
    %340 = vector.shape_cast %339 : vector<8x32xf32> to vector<1x8x32xf32>
    %cst_78 = arith.constant dense<0.000000e+00> : vector<1xf32>
    %341 = vector.multi_reduction <add>, %340, %cst_78 [1, 2] : vector<1x8x32xf32> to vector<1xf32>
    %342 = vector.shape_cast %341 : vector<1xf32> to vector<1x1x1xf32>
    %343 = vector.extract %342[0, 0, 0] : f32 from vector<1x1x1xf32>
    %344 = vector.broadcast %343 : f32 to vector<1x1xf32>
    %345 = arith.mulf %314, %150 : vector<8x32xf32>
    %346 = vector.shape_cast %345 : vector<8x32xf32> to vector<1x8x32xf32>
    %cst_79 = arith.constant dense<0.000000e+00> : vector<1xf32>
    %347 = vector.multi_reduction <add>, %346, %cst_79 [1, 2] : vector<1x8x32xf32> to vector<1xf32>
    %348 = vector.shape_cast %347 : vector<1xf32> to vector<1x1x1xf32>
    %349 = vector.extract %348[0, 0, 0] : f32 from vector<1x1x1xf32>
    %350 = vector.broadcast %349 : f32 to vector<1x1xf32>
    %351 = arith.mulf %314, %227 : vector<8x32xf32>
    %352 = vector.shape_cast %351 : vector<8x32xf32> to vector<1x8x32xf32>
    %cst_80 = arith.constant dense<0.000000e+00> : vector<1xf32>
    %353 = vector.multi_reduction <add>, %352, %cst_80 [1, 2] : vector<1x8x32xf32> to vector<1xf32>
    %354 = vector.shape_cast %353 : vector<1xf32> to vector<1x1x1xf32>
    %355 = vector.extract %354[0, 0, 0] : f32 from vector<1x1x1xf32>
    %356 = vector.broadcast %355 : f32 to vector<1x1xf32>
    %357 = vector.shape_cast %313 : vector<8x32xf32> to vector<1x8x32xf32>
    %cst_81 = arith.constant dense<0.000000e+00> : vector<1xf32>
    %358 = vector.multi_reduction <add>, %357, %cst_81 [1, 2] : vector<1x8x32xf32> to vector<1xf32>
    %359 = vector.shape_cast %358 : vector<1xf32> to vector<1x1x1xf32>
    %360 = vector.extract %359[0, 0, 0] : f32 from vector<1x1x1xf32>
    %361 = vector.broadcast %360 : f32 to vector<1x1xf32>
    %362 = vector.shape_cast %314 : vector<8x32xf32> to vector<1x8x32xf32>
    %cst_82 = arith.constant dense<0.000000e+00> : vector<1xf32>
    %363 = vector.multi_reduction <add>, %362, %cst_82 [1, 2] : vector<1x8x32xf32> to vector<1xf32>
    %364 = vector.shape_cast %363 : vector<1xf32> to vector<1x1x1xf32>
    %365 = vector.extract %364[0, 0, 0] : f32 from vector<1x1x1xf32>
    %366 = vector.broadcast %365 : f32 to vector<1x1xf32>
    %367 = arith.mulf %305, %150 : vector<8x32xf32>
    %368 = vector.shape_cast %367 : vector<8x32xf32> to vector<1x8x32xf32>
    %cst_83 = arith.constant dense<0.000000e+00> : vector<1xf32>
    %369 = vector.multi_reduction <add>, %368, %cst_83 [1, 2] : vector<1x8x32xf32> to vector<1xf32>
    %370 = vector.shape_cast %369 : vector<1xf32> to vector<1x1x1xf32>
    %371 = vector.extract %370[0, 0, 0] : f32 from vector<1x1x1xf32>
    %372 = vector.broadcast %371 : f32 to vector<1x1xf32>
    %373 = arith.mulf %305, %227 : vector<8x32xf32>
    %374 = vector.shape_cast %373 : vector<8x32xf32> to vector<1x8x32xf32>
    %cst_84 = arith.constant dense<0.000000e+00> : vector<1xf32>
    %375 = vector.multi_reduction <add>, %374, %cst_84 [1, 2] : vector<1x8x32xf32> to vector<1xf32>
    %376 = vector.shape_cast %375 : vector<1xf32> to vector<1x1x1xf32>
    %377 = vector.extract %376[0, 0, 0] : f32 from vector<1x1x1xf32>
    %378 = vector.broadcast %377 : f32 to vector<1x1xf32>
    %379 = vector.shape_cast %305 : vector<8x32xf32> to vector<1x8x32xf32>
    %cst_85 = arith.constant dense<0.000000e+00> : vector<1xf32>
    %380 = vector.multi_reduction <add>, %379, %cst_85 [1, 2] : vector<1x8x32xf32> to vector<1xf32>
    %381 = vector.shape_cast %380 : vector<1xf32> to vector<1x1x1xf32>
    %382 = vector.extract %381[0, 0, 0] : f32 from vector<1x1x1xf32>
    %383 = vector.broadcast %382 : f32 to vector<1x1xf32>
    %384 = tpu.concatenate %320, %326, %332, %338, %344, %350, %356, %361, %366, %372, %378, %383 in 1 : vector<1x1xf32>, vector<1x1xf32>, vector<1x1xf32>, vector<1x1xf32>, vector<1x1xf32>, vector<1x1xf32>, vector<1x1xf32>, vector<1x1xf32>, vector<1x1xf32>, vector<1x1xf32>, vector<1x1xf32>, vector<1x1xf32> -> vector<1x12xf32>
    %c0_i32_86 = arith.constant 0 : i32
    %385 = arith.sitofp %c0_i32_86 : i32 to f32
    %386 = vector.broadcast %385 : f32 to vector<7x12xf32>
    %387 = tpu.concatenate %384, %386 in 0 : vector<1x12xf32>, vector<7x12xf32> -> vector<8x12xf32>
    %388 = vector.broadcast %385 : f32 to vector<8x116xf32>
    %389 = tpu.concatenate %387, %388 in 1 : vector<8x12xf32>, vector<8x116xf32> -> vector<8x128xf32>
    %c0_87 = arith.constant 0 : index
    %c0_88 = arith.constant 0 : index
    %c0_89 = arith.constant 0 : index
    %c0_90 = arith.constant 0 : index
    %390 = vector.load %arg5[%c0_87, %c0_88, %c0_89, %c0_90] : memref<1x1x8x128xf32, #tpu.memory_space<vmem>>, vector<1x1x8x128xf32>
    %391 = vector.shape_cast %390 : vector<1x1x8x128xf32> to vector<8x128xf32>
    %392 = vector.shape_cast %389 : vector<8x128xf32> to vector<1x1x8x128xf32>
    tpu.vector_store %arg5[%c0_87, %c0_88, %c0_89, %c0_90], %392 {strides = array<i32>} : memref<1x1x8x128xf32, #tpu.memory_space<vmem>>, vector<1x1x8x128xf32>,
    return
  }
  func.func @transform_0(%arg0: i32, %arg1: i32) -> (i32, i32, i32, i32) {
    %c0_i32 = arith.constant 0 : i32
    %c0_i32_0 = arith.constant 0 : i32
    %c0_i32_1 = arith.constant 0 : i32
    %c0_i32_2 = arith.constant 0 : i32
    return %arg0, %c0_i32, %c0_i32_0, %c0_i32_1 : i32, i32, i32, i32
  }
  func.func @transform_1(%arg0: i32, %arg1: i32) -> i32 {
    %c0_i32 = arith.constant 0 : i32
    %c0_i32_0 = arith.constant 0 : i32
    return %c0_i32 : i32
  }
  func.func @transform_2(%arg0: i32, %arg1: i32) -> i32 {
    %c0_i32 = arith.constant 0 : i32
    %c0_i32_0 = arith.constant 0 : i32
    return %c0_i32 : i32
  }
  func.func @transform_3(%arg0: i32, %arg1: i32) -> (i32, i32, i32, i32) {
    %c0_i32 = arith.constant 0 : i32
    %c0_i32_0 = arith.constant 0 : i32
    %c0_i32_1 = arith.constant 0 : i32
    return %arg0, %arg1, %c0_i32, %c0_i32_0 : i32, i32, i32, i32
  }
}

</mosaic_0001>

<llo_original>
// kernel: tpu_custom_call.1
$region0: #{tpu_custom_call.1}
  #allocation0 [shape = 'u32[]', space=smem, size = 0x4, offset = 0x4, fixed_abs, tag = 'smem constant byte address 0x4 - core index']
  #allocation1 [shape = 'u32[72,128]{1,0:T(1,128)}', space=vmem, size = 0x9000, scoped, tag = 'internal scratch']
  %s0 = inlined_call_operand.vmem [shape: f32[1,2,34,34], index: 0, kind: input, shape index: {}]
  %s1 = inlined_call_operand.vmem [shape: f32[54], index: 1, kind: input, shape index: {}]
  %s2 = inlined_call_operand.vmem [shape: f32[3], index: 2, kind: input, shape index: {}]
  %s3 = inlined_call_operand.hbm [shape: f32[1,4,8,128], index: 3, kind: output, shape index: {}]
  %s4 = sld [smem:[#allocation0]]
  $region53: #{tpu_custom_call.1} parent=0
    _
  %s6 = ssub.s32 1, %s4
  %s7 = scalar_select 0, %s6, %s4
  $region1: #{tpu_custom_call.1} parent=0
    #allocation2 [shape = 'u8[512]{0}', space=smem, size = 0x200, scoped, tag = 'input window, operand 1, single buffered']
    #allocation3 [shape = 's32[2]{0}', space=sflag, size = 0x8, scoped, tag = 'scoped memory for tpu_custom_call.1']
    #allocation4 [shape = 's32[2]{0}', space=sflag, size = 0x8, scoped, tag = 'scoped memory for tpu_custom_call.1']
    #allocation5 [shape = 'u8[512]{0}', space=smem, size = 0x200, scoped, tag = 'input window, operand 2, single buffered']
    #allocation6 [shape = 's32[1]{0}', space=sflag, size = 0x4, scoped, tag = 'scoped memory for tpu_custom_call.1']
    #allocation7 [shape = 'u8[8192]{0}', space=vmem, size = 0x2000, scoped, tag = 'output window, operand 0']
    %8 = vsyncpa [#allocation4], 0
    %9 = vsyncpa [#allocation6], 0
    %10 = vsyncpa [#allocation3], 0
    %s11 = scalar_lea.sflag [#allocation3], 1
    %12 = vsyncpa %s11, 0
    loop: start=0, step=1, limit=6
    $region2: #{tpu_custom_call.1} parent=1 // loop_pre_header
      _
    $region3: #{tpu_custom_call.1} parent=1 // loop_header
      %s14 = sphi 0, %s18
      %p15 = scmp.ge.s32.totalorder %s14, 6
      %s21 = sphi 0, %s33
      %s22 = sphi 0, %s29
      %s23 = sphi 0, %s21
      %s24 = sphi 0, %s22
      %s25 = sphi 0, %s23
      %s26 = sphi 0, %s24
      %s36 = sphi 0, %s38
      %s39 = sphi 0, %s36
      %s40 = sphi 0, %s39
      %s56 = sphi 0, %s40
      %s60 = sphi 0, %s60
      %s62 = sphi 0, %s60
      %s63 = sphi 0, %s62
      %s77 = sphi 0, %s63
      %s81 = sphi 0, %s81
      %s83 = sphi 0, %s81
      %s84 = sphi 0, %s83
      %s98 = sphi 0, %s84
      %s106 = sphi 0, %s108
      %s109 = sphi 0, %s106
      %s110 = sphi 0, %s109
      %s126 = sphi 0, %s110
    $region4: #{tpu_custom_call.1} parent=1 // loop_header_branch
      %17 = sbr.rel (%p15) target = $region8
    $region5: #{tpu_custom_call.1} parent=1 // loop_body
      %s19 = ssub.s32 %s14, 1
      %s20 = ssub.s32 %s14, 2
      %s27 = sadd.s32 1, %s22
      %p28 = scmp.ge.s32.totalorder %s27, 4
      %s29 = scalar_select %p28, 0, %s27
      %s30 = sadd.s32 1, %s21
      %s31 = scalar_select %p28, %s30, %s21
      %p32 = scmp.ge.s32.totalorder %s31, 1
      %s33 = scalar_select %p32, 0, %s31
      %s34 = ssub.s32 %s21, %s33
      %p35 = scmp.eq.s32.totalorder %s34, 0
      %s37 = sadd.s32 %s36, 1
      %s38 = scalar_select %p35, %s36, %s37
      %p41 = pneg %p35
      %p42 = scmp.eq.s32.totalorder %s14, 3
      %p43 = por %p41, %p42
      %p44 = scmp.ne.s32.totalorder %s36, %s39
      %p45 = scmp.eq.s32.totalorder %s14, 0
      %p46 = por %p44, %p45
      %p47 = scmp.ne.s32.totalorder %s36, %s39
      %p48 = scmp.eq.s32.totalorder %s19, 3
      %p49 = por %p47, %p48
      %p50 = scmp.ne.s32.totalorder %s39, %s40
      %p51 = scmp.eq.s32.totalorder %s19, 0
      %p52 = por %p50, %p51
      %p53 = scmp.ne.s32.totalorder %s39, %s40
      %p54 = scmp.eq.s32.totalorder %s20, 3
      %p55 = por %p53, %p54
      %p57 = scmp.ne.s32.totalorder %s40, %s56
      %p58 = scmp.eq.s32.totalorder %s20, 0
      %p59 = por %p57, %p58
      %s61 = sadd.s32 %s60, 1
      %p64 = scmp.eq.s32.totalorder %s14, 3
      %p65 = scmp.ne.s32.totalorder %s60, %s62
      %p66 = scmp.eq.s32.totalorder %s14, 0
      %p67 = por %p65, %p66
      %p68 = scmp.ne.s32.totalorder %s60, %s62
      %p69 = scmp.eq.s32.totalorder %s19, 3
      %p70 = por %p68, %p69
      %p71 = scmp.ne.s32.totalorder %s62, %s63
      %p72 = scmp.eq.s32.totalorder %s19, 0
      %p73 = por %p71, %p72
      %p74 = scmp.ne.s32.totalorder %s62, %s63
      %p75 = scmp.eq.s32.totalorder %s20, 3
      %p76 = por %p74, %p75
      %p78 = scmp.ne.s32.totalorder %s63, %s77
      %p79 = scmp.eq.s32.totalorder %s20, 0
      %p80 = por %p78, %p79
      %s82 = sadd.s32 %s81, 1
      %p85 = scmp.eq.s32.totalorder %s14, 3
      %p86 = scmp.ne.s32.totalorder %s81, %s83
      %p87 = scmp.eq.s32.totalorder %s14, 0
      %p88 = por %p86, %p87
      %p89 = scmp.ne.s32.totalorder %s81, %s83
      %p90 = scmp.eq.s32.totalorder %s19, 3
      %p91 = por %p89, %p90
      %p92 = scmp.ne.s32.totalorder %s83, %s84
      %p93 = scmp.eq.s32.totalorder %s19, 0
      %p94 = por %p92, %p93
      %p95 = scmp.ne.s32.totalorder %s83, %s84
      %p96 = scmp.eq.s32.totalorder %s20, 3
      %p97 = por %p95, %p96
      %p99 = scmp.ne.s32.totalorder %s84, %s98
      %p100 = scmp.eq.s32.totalorder %s20, 0
      %p101 = por %p99, %p100
      %s102 = ssub.s32 %s21, %s33
      %s103 = ssub.s32 %s22, %s29
      %s104 = sor.u32 %s102, %s103
      %p105 = scmp.eq.s32.totalorder %s104, 0
      %s107 = sadd.s32 %s106, 1
      %s108 = scalar_select %p105, %s106, %s107
      %p111 = pneg %p105
      %p112 = scmp.eq.s32.totalorder %s14, 3
      %p113 = por %p111, %p112
      %p114 = scmp.ne.s32.totalorder %s106, %s109
      %p115 = scmp.eq.s32.totalorder %s14, 0
      %p116 = por %p114, %p115
      %p117 = scmp.ne.s32.totalorder %s106, %s109
      %p118 = scmp.eq.s32.totalorder %s19, 3
      %p119 = por %p117, %p118
      %p120 = scmp.ne.s32.totalorder %s109, %s110
      %p121 = scmp.eq.s32.totalorder %s19, 0
      %p122 = por %p120, %p121
      %p123 = scmp.ne.s32.totalorder %s109, %s110
      %p124 = scmp.eq.s32.totalorder %s20, 3
      %p125 = por %p123, %p124
      %p127 = scmp.ne.s32.totalorder %s110, %s126
      %p128 = scmp.eq.s32.totalorder %s20, 0
      %p129 = por %p127, %p128
      %p130 = scmp.le.s32.totalorder 1, %s14
      %p131 = scmp.lt.s32.totalorder %s14, 5
      %p132 = pnand %p130, %p131
      %p133 = pneg %p132
      // Predicated region
      $region9: #{tpu_custom_call.1} parent=5 // pred_check
        _
      $region10: #{tpu_custom_call.1} parent=5 // pred_check_branch
        %135 = sbr.rel (%p132) target = $region12
      $region11: #{tpu_custom_call.1} parent=5 // pred_region
        %s136 = ssub.s32 %s14, 1
        // Predicated region
        $region13: #{tpu_custom_call.1} parent=11 // pred_check
          %p137 = pneg %p52
        $region14: #{tpu_custom_call.1} parent=11 // pred_check_branch
          %139 = sbr.rel (%p137) target = $region16
        $region15: #{tpu_custom_call.1} parent=11 // pred_region
          %p140 = scmp.lt.s32.totalorder %s23, 0
          %s141 = scalar_select %p140, %s23, 0
          %s142 = smul.addr %s141, 10
          %s143 = smul.addr %s142, 8
          %s144 = scalar_lea.vmem %s0, %s143
        $region16: #{tpu_custom_call.1} parent=11 // pred_fallthru
          _
        // Predicated region
        $region17: #{tpu_custom_call.1} parent=11 // pred_check
          %p145 = pneg %p73
        $region18: #{tpu_custom_call.1} parent=11 // pred_check_branch
          %147 = sbr.rel (%p145) target = $region20
        $region19: #{tpu_custom_call.1} parent=11 // pred_region
          %149 = vsyncadd [#allocation4], 0
          %s151 = sshll.u32 %s1, 4
          %s152 = int_to_ptr.vmem [resolvable:$true] %s151
          %154 = dma.vmem_to_smem %s152, 16, [#allocation2], [#allocation4]
        $region20: #{tpu_custom_call.1} parent=11 // pred_fallthru
          _
        // Predicated region
        $region21: #{tpu_custom_call.1} parent=11 // pred_check
          %p155 = pneg %p94
        $region22: #{tpu_custom_call.1} parent=11 // pred_check_branch
          %157 = sbr.rel (%p155) target = $region24
        $region23: #{tpu_custom_call.1} parent=11 // pred_region
          %159 = vsyncadd [#allocation6], 0
          %s161 = sshll.u32 %s2, 4
          %s162 = int_to_ptr.vmem [resolvable:$true] %s161
          %164 = dma.vmem_to_smem %s162, 16, [#allocation5], [#allocation6]
        $region24: #{tpu_custom_call.1} parent=11 // pred_fallthru
          _
      $region12: #{tpu_custom_call.1} parent=5 // pred_fallthru
        _
      %p165 = scmp.lt.s32.totalorder %s14, 4
      // Predicated region
      $region25: #{tpu_custom_call.1} parent=5 // pred_check
        %p166 = pneg %p165
      $region26: #{tpu_custom_call.1} parent=5 // pred_check_branch
        %168 = sbr.rel (%p166) target = $region28
      $region27: #{tpu_custom_call.1} parent=5 // pred_region
        _
      $region28: #{tpu_custom_call.1} parent=5 // pred_fallthru
        _
      %p169 = scmp.le.s32.totalorder 1, %s14
      %p170 = scmp.lt.s32.totalorder %s14, 5
      %p171 = pnand %p169, %p170
      %p172 = pneg %p171
      // Predicated region
      $region29: #{tpu_custom_call.1} parent=5 // pred_check
        _
      $region30: #{tpu_custom_call.1} parent=5 // pred_check_branch
        %174 = sbr.rel (%p171) target = $region32
      $region31: #{tpu_custom_call.1} parent=5 // pred_region
        %s175 = ssub.s32 %s14, 1
        // Predicated region
        $region33: #{tpu_custom_call.1} parent=31 // pred_check
          %p176 = pneg %p73
        $region34: #{tpu_custom_call.1} parent=31 // pred_check_branch
          %178 = sbr.rel (%p176) target = $region36
        $region35: #{tpu_custom_call.1} parent=31 // pred_region
          %180 = dma.done [#allocation4], 16
        $region36: #{tpu_custom_call.1} parent=31 // pred_fallthru
          _
        // Predicated region
        $region37: #{tpu_custom_call.1} parent=31 // pred_check
          %p181 = pneg %p94
        $region38: #{tpu_custom_call.1} parent=31 // pred_check_branch
          %183 = sbr.rel (%p181) target = $region40
        $region39: #{tpu_custom_call.1} parent=31 // pred_region
          %185 = dma.done [#allocation6], 16
        $region40: #{tpu_custom_call.1} parent=31 // pred_fallthru
          _
        %186 = sfence
        %p187 = scmp.lt.s32.totalorder %s23, 0
        %s188 = scalar_select %p187, %s23, 0
        %s189 = smul.addr %s188, 10
        %s190 = smul.addr %s189, 8
        %s191 = scalar_lea.vmem %s0, %s190
        %p192 = pneg %p52
        %p193 = pneg %p49
        %p194 = pneg %p73
        %p195 = pneg %p70
        %p196 = pneg %p94
        %p197 = pneg %p91
        %p198 = pneg %p122
        %p199 = pneg %p119
        %s200 = sand.u32 %s109, 1
        %s201 = scalar_lea.sflag [#allocation3], %s200
        %s202 = sand.u32 %s109, 1
        %s203 = smul.addr %s202, 8
        %s204 = scalar_lea.vmem [#allocation7], %s203
        %p205 = scmp.lt.s32.totalorder %s23, 0
        %s206 = scalar_select %p205, %s23, 0
        %s207 = smul.addr %s206, 10
        %s208 = smul.addr %s207, 8
        %s209 = scalar_lea.vmem %s0, %s208
        %s210 = smul.u32 %s24, 8
        %s211 = scalar_lea.vmem %s209, %s210
        %v212 = vld [vmem:[%s211] sm:$0xff]
        %s213 = sadd.s32 %s210, 1
        %s214 = scalar_lea.vmem %s209, %s213
        %v215 = vld [vmem:[%s214] sm:$0xff]
        %s216 = sadd.s32 %s210, 2
        %s217 = scalar_lea.vmem %s209, %s216
        %v218 = vld [vmem:[%s217] sm:$0xff]
        %s219 = sadd.s32 %s210, 40
        %s220 = scalar_lea.vmem %s209, %s219
        %v221 = vld [vmem:[%s220] sm:$0xff]
        %s222 = sadd.s32 %s213, 40
        %s223 = scalar_lea.vmem %s209, %s222
        %v224 = vld [vmem:[%s223] sm:$0xff]
        %s225 = sadd.s32 %s216, 40
        %s226 = scalar_lea.vmem %s209, %s225
        %v227 = vld [vmem:[%s226] sm:$0xff]
        %s228 = sld [smem:[#allocation5]]
        %v229 = vstv %s228
        %s230 = sld [smem:[#allocation2]]
        %v231 = vstv %s230
        %v232 = vmul.f32 %v231, %v212
        %v233 = vadd.f32 %v229, %v232
        %s234 = sld [smem:[#allocation2 + $0x1]]
        %v235 = vstv %s234
        %v236 = vmul.f32 %v235, %v212
        %238 = vrot.lane.b32.xlu0 %v236, 127
        %v239 = vpop.permute.xlu0 %238
        %v241 = vadd.f32 %v233, %v239
        %s242 = sld [smem:[#allocation2 + $0x2]]
        %v243 = vstv %s242
        %v244 = vmul.f32 %v243, %v212
        %246 = vrot.lane.b32.xlu0 %v244, 126
        %v247 = vpop.permute.xlu0 %246
        %v249 = vadd.f32 %v241, %v247
        %s250 = sld [smem:[#allocation2 + $0x3]]
        %v251 = vstv %s250
        %v252 = vmul.f32 %v251, %v215
        %v253 = vadd.f32 %v249, %v252
        %s254 = sld [smem:[#allocation2 + $0x4]]
        %v255 = vstv %s254
        %v256 = vmul.f32 %v255, %v215
        %258 = vrot.lane.b32.xlu0 %v256, 127
        %v259 = vpop.permute.xlu0 %258
        %v261 = vadd.f32 %v253, %v259
        %s262 = sld [smem:[#allocation2 + $0x5]]
        %v263 = vstv %s262
        %v264 = vmul.f32 %v263, %v215
        %266 = vrot.lane.b32.xlu0 %v264, 126
        %v267 = vpop.permute.xlu0 %266
        %v269 = vadd.f32 %v261, %v267
        %s270 = sld [smem:[#allocation2 + $0x6]]
        %v271 = vstv %s270
        %v272 = vmul.f32 %v271, %v218
        %v273 = vadd.f32 %v269, %v272
        %s274 = sld [smem:[#allocation2 + $0x7]]
        %v275 = vstv %s274
        %v276 = vmul.f32 %v275, %v218
        %278 = vrot.lane.b32.xlu0 %v276, 127
        %v279 = vpop.permute.xlu0 %278
        %v281 = vadd.f32 %v273, %v279
        %s282 = sld [smem:[#allocation2 + $0x8]]
        %v283 = vstv %s282
        %v284 = vmul.f32 %v283, %v218
        %286 = vrot.lane.b32.xlu0 %v284, 126
        %v287 = vpop.permute.xlu0 %286
        %v289 = vadd.f32 %v281, %v287
        %s290 = sld [smem:[#allocation2 + $0x9]]
        %v291 = vstv %s290
        %v292 = vmul.f32 %v291, %v221
        %v293 = vadd.f32 %v289, %v292
        %s294 = sld [smem:[#allocation2 + $0xa]]
        %v295 = vstv %s294
        %v296 = vmul.f32 %v295, %v221
        %298 = vrot.lane.b32.xlu0 %v296, 127
        %v299 = vpop.permute.xlu0 %298
        %v301 = vadd.f32 %v293, %v299
        %s302 = sld [smem:[#allocation2 + $0xb]]
        %v303 = vstv %s302
        %v304 = vmul.f32 %v303, %v221
        %306 = vrot.lane.b32.xlu0 %v304, 126
        %v307 = vpop.permute.xlu0 %306
        %v309 = vadd.f32 %v301, %v307
        %s310 = sld [smem:[#allocation2 + $0xc]]
        %v311 = vstv %s310
        %v312 = vmul.f32 %v311, %v224
        %v313 = vadd.f32 %v309, %v312
        %s314 = sld [smem:[#allocation2 + $0xd]]
        %v315 = vstv %s314
        %v316 = vmul.f32 %v315, %v224
        %318 = vrot.lane.b32.xlu0 %v316, 127
        %v319 = vpop.permute.xlu0 %318
        %v321 = vadd.f32 %v313, %v319
        %s322 = sld [smem:[#allocation2 + $0xe]]
        %v323 = vstv %s322
        %v324 = vmul.f32 %v323, %v224
        %326 = vrot.lane.b32.xlu0 %v324, 126
        %v327 = vpop.permute.xlu0 %326
        %v329 = vadd.f32 %v321, %v327
        %s330 = sld [smem:[#allocation2 + $0xf]]
        %v331 = vstv %s330
        %v332 = vmul.f32 %v331, %v227
        %v333 = vadd.f32 %v329, %v332
        %s334 = sld [smem:[#allocation2 + $0x10]]
        %v335 = vstv %s334
        %v336 = vmul.f32 %v335, %v227
        %338 = vrot.lane.b32.xlu0 %v336, 127
        %v339 = vpop.permute.xlu0 %338
        %v341 = vadd.f32 %v333, %v339
        %s342 = sld [smem:[#allocation2 + $0x11]]
        %v343 = vstv %s342
        %v344 = vmul.f32 %v343, %v227
        %346 = vrot.lane.b32.xlu0 %v344, 126
        %v347 = vpop.permute.xlu0 %346
        %v349 = vadd.f32 %v341, %v347
        %v350 = vmul.f32 %v349, 0.2
        %v351 = vmax.f32 %v349, %v350
        %s352 = sld [smem:[#allocation5 + $0x1]]
        %v353 = vstv %s352
        %s354 = sld [smem:[#allocation2 + $0x12]]
        %v355 = vstv %s354
        %v356 = vmul.f32 %v355, %v212
        %v357 = vadd.f32 %v353, %v356
        %s358 = sld [smem:[#allocation2 + $0x13]]
        %v359 = vstv %s358
        %v360 = vmul.f32 %v359, %v212
        %362 = vrot.lane.b32.xlu0 %v360, 127
        %v363 = vpop.permute.xlu0 %362
        %v365 = vadd.f32 %v357, %v363
        %s366 = sld [smem:[#allocation2 + $0x14]]
        %v367 = vstv %s366
        %v368 = vmul.f32 %v367, %v212
        %370 = vrot.lane.b32.xlu0 %v368, 126
        %v371 = vpop.permute.xlu0 %370
        %v373 = vadd.f32 %v365, %v371
        %s374 = sld [smem:[#allocation2 + $0x15]]
        %v375 = vstv %s374
        %v376 = vmul.f32 %v375, %v215
        %v377 = vadd.f32 %v373, %v376
        %s378 = sld [smem:[#allocation2 + $0x16]]
        %v379 = vstv %s378
        %v380 = vmul.f32 %v379, %v215
        %382 = vrot.lane.b32.xlu0 %v380, 127
        %v383 = vpop.permute.xlu0 %382
        %v385 = vadd.f32 %v377, %v383
        %s386 = sld [smem:[#allocation2 + $0x17]]
        %v387 = vstv %s386
        %v388 = vmul.f32 %v387, %v215
        %390 = vrot.lane.b32.xlu0 %v388, 126
        %v391 = vpop.permute.xlu0 %390
        %v393 = vadd.f32 %v385, %v391
        %s394 = sld [smem:[#allocation2 + $0x18]]
        %v395 = vstv %s394
        %v396 = vmul.f32 %v395, %v218
        %v397 = vadd.f32 %v393, %v396
        %s398 = sld [smem:[#allocation2 + $0x19]]
        %v399 = vstv %s398
        %v400 = vmul.f32 %v399, %v218
        %402 = vrot.lane.b32.xlu0 %v400, 127
        %v403 = vpop.permute.xlu0 %402
        %v405 = vadd.f32 %v397, %v403
        %s406 = sld [smem:[#allocation2 + $0x1a]]
        %v407 = vstv %s406
        %v408 = vmul.f32 %v407, %v218
        %410 = vrot.lane.b32.xlu0 %v408, 126
        %v411 = vpop.permute.xlu0 %410
        %v413 = vadd.f32 %v405, %v411
        %s414 = sld [smem:[#allocation2 + $0x1b]]
        %v415 = vstv %s414
        %v416 = vmul.f32 %v415, %v221
        %v417 = vadd.f32 %v413, %v416
        %s418 = sld [smem:[#allocation2 + $0x1c]]
        %v419 = vstv %s418
        %v420 = vmul.f32 %v419, %v221
        %422 = vrot.lane.b32.xlu0 %v420, 127
        %v423 = vpop.permute.xlu0 %422
        %v425 = vadd.f32 %v417, %v423
        %s426 = sld [smem:[#allocation2 + $0x1d]]
        %v427 = vstv %s426
        %v428 = vmul.f32 %v427, %v221
        %430 = vrot.lane.b32.xlu0 %v428, 126
        %v431 = vpop.permute.xlu0 %430
        %v433 = vadd.f32 %v425, %v431
        %s434 = sld [smem:[#allocation2 + $0x1e]]
        %v435 = vstv %s434
        %v436 = vmul.f32 %v435, %v224
        %v437 = vadd.f32 %v433, %v436
        %s438 = sld [smem:[#allocation2 + $0x1f]]
        %v439 = vstv %s438
        %v440 = vmul.f32 %v439, %v224
        %442 = vrot.lane.b32.xlu0 %v440, 127
        %v443 = vpop.permute.xlu0 %442
        %v445 = vadd.f32 %v437, %v443
        %s446 = sld [smem:[#allocation2 + $0x20]]
        %v447 = vstv %s446
        %v448 = vmul.f32 %v447, %v224
        %450 = vrot.lane.b32.xlu0 %v448, 126
        %v451 = vpop.permute.xlu0 %450
        %v453 = vadd.f32 %v445, %v451
        %s454 = sld [smem:[#allocation2 + $0x21]]
        %v455 = vstv %s454
        %v456 = vmul.f32 %v455, %v227
        %v457 = vadd.f32 %v453, %v456
        %s458 = sld [smem:[#allocation2 + $0x22]]
        %v459 = vstv %s458
        %v460 = vmul.f32 %v459, %v227
        %462 = vrot.lane.b32.xlu0 %v460, 127
        %v463 = vpop.permute.xlu0 %462
        %v465 = vadd.f32 %v457, %v463
        %s466 = sld [smem:[#allocation2 + $0x23]]
        %v467 = vstv %s466
        %v468 = vmul.f32 %v467, %v227
        %470 = vrot.lane.b32.xlu0 %v468, 126
        %v471 = vpop.permute.xlu0 %470
        %v473 = vadd.f32 %v465, %v471
        %v474 = vmul.f32 %v473, 0.2
        %v475 = vmax.f32 %v473, %v474
        %s476 = sld [smem:[#allocation5 + $0x2]]
        %v477 = vstv %s476
        %s478 = sld [smem:[#allocation2 + $0x24]]
        %v479 = vstv %s478
        %v480 = vmul.f32 %v479, %v212
        %v481 = vadd.f32 %v477, %v480
        %s482 = sld [smem:[#allocation2 + $0x25]]
        %v483 = vstv %s482
        %v484 = vmul.f32 %v483, %v212
        %486 = vrot.lane.b32.xlu0 %v484, 127
        %v487 = vpop.permute.xlu0 %486
        %v489 = vadd.f32 %v481, %v487
        %s490 = sld [smem:[#allocation2 + $0x26]]
        %v491 = vstv %s490
        %v492 = vmul.f32 %v491, %v212
        %494 = vrot.lane.b32.xlu0 %v492, 126
        %v495 = vpop.permute.xlu0 %494
        %v497 = vadd.f32 %v489, %v495
        %s498 = sld [smem:[#allocation2 + $0x27]]
        %v499 = vstv %s498
        %v500 = vmul.f32 %v499, %v215
        %v501 = vadd.f32 %v497, %v500
        %s502 = sld [smem:[#allocation2 + $0x28]]
        %v503 = vstv %s502
        %v504 = vmul.f32 %v503, %v215
        %506 = vrot.lane.b32.xlu0 %v504, 127
        %v507 = vpop.permute.xlu0 %506
        %v509 = vadd.f32 %v501, %v507
        %s510 = sld [smem:[#allocation2 + $0x29]]
        %v511 = vstv %s510
        %v512 = vmul.f32 %v511, %v215
        %514 = vrot.lane.b32.xlu0 %v512, 126
        %v515 = vpop.permute.xlu0 %514
        %v517 = vadd.f32 %v509, %v515
        %s518 = sld [smem:[#allocation2 + $0x2a]]
        %v519 = vstv %s518
        %v520 = vmul.f32 %v519, %v218
        %v521 = vadd.f32 %v517, %v520
        %s522 = sld [smem:[#allocation2 + $0x2b]]
        %v523 = vstv %s522
        %v524 = vmul.f32 %v523, %v218
        %526 = vrot.lane.b32.xlu0 %v524, 127
        %v527 = vpop.permute.xlu0 %526
        %v529 = vadd.f32 %v521, %v527
        %s530 = sld [smem:[#allocation2 + $0x2c]]
        %v531 = vstv %s530
        %v532 = vmul.f32 %v531, %v218
        %534 = vrot.lane.b32.xlu0 %v532, 126
        %v535 = vpop.permute.xlu0 %534
        %v537 = vadd.f32 %v529, %v535
        %s538 = sld [smem:[#allocation2 + $0x2d]]
        %v539 = vstv %s538
        %v540 = vmul.f32 %v539, %v221
        %v541 = vadd.f32 %v537, %v540
        %s542 = sld [smem:[#allocation2 + $0x2e]]
        %v543 = vstv %s542
        %v544 = vmul.f32 %v543, %v221
        %546 = vrot.lane.b32.xlu0 %v544, 127
        %v547 = vpop.permute.xlu0 %546
        %v549 = vadd.f32 %v541, %v547
        %s550 = sld [smem:[#allocation2 + $0x2f]]
        %v551 = vstv %s550
        %v552 = vmul.f32 %v551, %v221
        %554 = vrot.lane.b32.xlu0 %v552, 126
        %v555 = vpop.permute.xlu0 %554
        %v557 = vadd.f32 %v549, %v555
        %s558 = sld [smem:[#allocation2 + $0x30]]
        %v559 = vstv %s558
        %v560 = vmul.f32 %v559, %v224
        %v561 = vadd.f32 %v557, %v560
        %s562 = sld [smem:[#allocation2 + $0x31]]
        %v563 = vstv %s562
        %v564 = vmul.f32 %v563, %v224
        %566 = vrot.lane.b32.xlu0 %v564, 127
        %v567 = vpop.permute.xlu0 %566
        %v569 = vadd.f32 %v561, %v567
        %s570 = sld [smem:[#allocation2 + $0x32]]
        %v571 = vstv %s570
        %v572 = vmul.f32 %v571, %v224
        %574 = vrot.lane.b32.xlu0 %v572, 126
        %v575 = vpop.permute.xlu0 %574
        %v577 = vadd.f32 %v569, %v575
        %s578 = sld [smem:[#allocation2 + $0x33]]
        %v579 = vstv %s578
        %v580 = vmul.f32 %v579, %v227
        %v581 = vadd.f32 %v577, %v580
        %s582 = sld [smem:[#allocation2 + $0x34]]
        %v583 = vstv %s582
        %v584 = vmul.f32 %v583, %v227
        %586 = vrot.lane.b32.xlu0 %v584, 127
        %v587 = vpop.permute.xlu0 %586
        %v589 = vadd.f32 %v581, %v587
        %s590 = sld [smem:[#allocation2 + $0x35]]
        %v591 = vstv %s590
        %v592 = vmul.f32 %v591, %v227
        %594 = vrot.lane.b32.xlu0 %v592, 126
        %v595 = vpop.permute.xlu0 %594
        %v597 = vadd.f32 %v589, %v595
        %v598 = vmul.f32 %v597, 0.2
        %v599 = vmax.f32 %v597, %v598
        %v600 = vand.u32 2147483647, %v599
        %v601 = vlaneseq
        %v602 = vshrl.u32 %v601, 7
        %v603 = vcvt.s32.f32 %v602
        %s604 = scvt.s32.f32 %s210
        %v605 = vstv %s604
        %v606 = vadd.f32 %v603, %v605
        %v607 = vlaneseq
        %v608 = vand.u32 %v607, 127
        %v609 = vcvt.s32.f32 %v608
        %v610 = vmul.f32 %v600, %v606
        %v611 = vmul.f32 %v600, %v609
        %v612 = vmul.f32 %v610, %v606
        %vm613 = vcmask 261120
        %v614 = vsel %vm613, %v612, 0.0
        %615 = vadd.xlane.f32.xlu0 %v614
        %v616 = vpop.xlane.xlu0 %615
        %v617 = vrot.slane %v616, 4
        %v618 = vadd.f32 %v616, %v617
        %v619 = vrot.slane %v618, 2
        %v620 = vadd.f32 %v618, %v619
        %v621 = vrot.slane %v620, 1
        %v622 = vadd.f32 %v620, %v621
        %s623 = vtos %v622
        %v624 = vstv %s623
        %v625 = vmul.f32 %v610, %v609
        %v626 = vsel %vm613, %v625, 0.0
        %627 = vadd.xlane.f32.xlu0 %v626
        %v628 = vpop.xlane.xlu0 %627
        %v629 = vrot.slane %v628, 4
        %v630 = vadd.f32 %v628, %v629
        %v631 = vrot.slane %v630, 2
        %v632 = vadd.f32 %v630, %v631
        %v633 = vrot.slane %v632, 1
        %v634 = vadd.f32 %v632, %v633
        %s635 = vtos %v634
        %v636 = vstv %s635
        %v637 = vmul.f32 %v611, %v609
        %v638 = vsel %vm613, %v637, 0.0
        %639 = vadd.xlane.f32.xlu0 %v638
        %v640 = vpop.xlane.xlu0 %639
        %v641 = vrot.slane %v640, 4
        %v642 = vadd.f32 %v640, %v641
        %v643 = vrot.slane %v642, 2
        %v644 = vadd.f32 %v642, %v643
        %v645 = vrot.slane %v644, 1
        %v646 = vadd.f32 %v644, %v645
        %s647 = vtos %v646
        %v648 = vstv %s647
        %v649 = vmul.f32 %v610, %v351
        %v650 = vsel %vm613, %v649, 0.0
        %651 = vadd.xlane.f32.xlu0 %v650
        %v652 = vpop.xlane.xlu0 %651
        %v653 = vrot.slane %v652, 4
        %v654 = vadd.f32 %v652, %v653
        %v655 = vrot.slane %v654, 2
        %v656 = vadd.f32 %v654, %v655
        %v657 = vrot.slane %v656, 1
        %v658 = vadd.f32 %v656, %v657
        %s659 = vtos %v658
        %v660 = vstv %s659
        %v661 = vmul.f32 %v610, %v475
        %v662 = vsel %vm613, %v661, 0.0
        %663 = vadd.xlane.f32.xlu0 %v662
        %v664 = vpop.xlane.xlu0 %663
        %v665 = vrot.slane %v664, 4
        %v666 = vadd.f32 %v664, %v665
        %v667 = vrot.slane %v666, 2
        %v668 = vadd.f32 %v666, %v667
        %v669 = vrot.slane %v668, 1
        %v670 = vadd.f32 %v668, %v669
        %s671 = vtos %v670
        %v672 = vstv %s671
        %v673 = vmul.f32 %v611, %v351
        %v674 = vsel %vm613, %v673, 0.0
        %675 = vadd.xlane.f32.xlu0 %v674
        %v676 = vpop.xlane.xlu0 %675
        %v677 = vrot.slane %v676, 4
        %v678 = vadd.f32 %v676, %v677
        %v679 = vrot.slane %v678, 2
        %v680 = vadd.f32 %v678, %v679
        %v681 = vrot.slane %v680, 1
        %v682 = vadd.f32 %v680, %v681
        %s683 = vtos %v682
        %v684 = vstv %s683
        %v685 = vmul.f32 %v611, %v475
        %v686 = vsel %vm613, %v685, 0.0
        %687 = vadd.xlane.f32.xlu0 %v686
        %v688 = vpop.xlane.xlu0 %687
        %v689 = vrot.slane %v688, 4
        %v690 = vadd.f32 %v688, %v689
        %v691 = vrot.slane %v690, 2
        %v692 = vadd.f32 %v690, %v691
        %v693 = vrot.slane %v692, 1
        %v694 = vadd.f32 %v692, %v693
        %s695 = vtos %v694
        %v696 = vstv %s695
        %v697 = vsel %vm613, %v610, 0.0
        %698 = vadd.xlane.f32.xlu0 %v697
        %v699 = vpop.xlane.xlu0 %698
        %v700 = vrot.slane %v699, 4
        %v701 = vadd.f32 %v699, %v700
        %v702 = vrot.slane %v701, 2
        %v703 = vadd.f32 %v701, %v702
        %v704 = vrot.slane %v703, 1
        %v705 = vadd.f32 %v703, %v704
        %s706 = vtos %v705
        %v707 = vstv %s706
        %v708 = vsel %vm613, %v611, 0.0
        %709 = vadd.xlane.f32.xlu0 %v708
        %v710 = vpop.xlane.xlu0 %709
        %v711 = vrot.slane %v710, 4
        %v712 = vadd.f32 %v710, %v711
        %v713 = vrot.slane %v712, 2
        %v714 = vadd.f32 %v712, %v713
        %v715 = vrot.slane %v714, 1
        %v716 = vadd.f32 %v714, %v715
        %s717 = vtos %v716
        %v718 = vstv %s717
        %v719 = vmul.f32 %v600, %v351
        %v720 = vsel %vm613, %v719, 0.0
        %721 = vadd.xlane.f32.xlu0 %v720
        %v722 = vpop.xlane.xlu0 %721
        %v723 = vrot.slane %v722, 4
        %v724 = vadd.f32 %v722, %v723
        %v725 = vrot.slane %v724, 2
        %v726 = vadd.f32 %v724, %v725
        %v727 = vrot.slane %v726, 1
        %v728 = vadd.f32 %v726, %v727
        %s729 = vtos %v728
        %v730 = vstv %s729
        %v731 = vmul.f32 %v600, %v475
        %v732 = vsel %vm613, %v731, 0.0
        %733 = vadd.xlane.f32.xlu0 %v732
        %v734 = vpop.xlane.xlu0 %733
        %v735 = vrot.slane %v734, 4
        %v736 = vadd.f32 %v734, %v735
        %v737 = vrot.slane %v736, 2
        %v738 = vadd.f32 %v736, %v737
        %v739 = vrot.slane %v738, 1
        %v740 = vadd.f32 %v738, %v739
        %s741 = vtos %v740
        %v742 = vstv %s741
        %v743 = vsel %vm613, %v600, 0.0
        %744 = vadd.xlane.f32.xlu0 %v743
        %v745 = vpop.xlane.xlu0 %744
        %v746 = vrot.slane %v745, 4
        %v747 = vadd.f32 %v745, %v746
        %v748 = vrot.slane %v747, 2
        %v749 = vadd.f32 %v747, %v748
        %v750 = vrot.slane %v749, 1
        %v751 = vadd.f32 %v749, %v750
        %s752 = vtos %v751
        %v753 = vstv %s752
        %vm754 = vcmask 7168
        %v755 = vsel %vm754, %v624, %v636
        %vm756 = vcmask 15360
        %v757 = vsel %vm756, %v755, %v648
        %vm758 = vcmask 23552
        %v759 = vsel %vm758, %v757, %v660
        %vm760 = vcmask 31744
        %v761 = vsel %vm760, %v759, %v672
        %vm762 = vcmask 39936
        %v763 = vsel %vm762, %v761, %v684
        %vm764 = vcmask 48128
        %v765 = vsel %vm764, %v763, %v696
        %vm766 = vcmask 56320
        %v767 = vsel %vm766, %v765, %v707
        %vm768 = vcmask 64512
        %v769 = vsel %vm768, %v767, %v718
        %vm770 = vcmask 72704
        %v771 = vsel %vm770, %v769, %v730
        %vm772 = vcmask 80896
        %v773 = vsel %vm772, %v771, %v742
        %vm774 = vcmask 89088
        %v775 = vsel %vm774, %v773, %v753
        %vm776 = vcmask 1040384
        %v777 = vsel %vm776, %v775, 0.0
        %vm778 = vcmask 97280
        %v779 = vsel %vm778, %v777, 0.0
        %780 = vst [vmem:[%s204] sm:$0xff] %v779
        %s781 = sand.u32 %s109, 1
        %s782 = scalar_lea.sflag [#allocation3], %s781
        %s783 = sand.u32 %s109, 1
        %s784 = smul.addr %s783, 8
        %s785 = scalar_lea.vmem [#allocation7], %s784
        // Predicated region
        $region41: #{tpu_custom_call.1} parent=31 // pred_check
          %p786 = pneg %p119
        $region42: #{tpu_custom_call.1} parent=31 // pred_check_branch
          %788 = sbr.rel (%p786) target = $region44
        $region43: #{tpu_custom_call.1} parent=31 // pred_region
          %790 = vsyncadd %s782, 0
          %s791 = smul.addr %s23, 4
          %s792 = sadd.s32 %s24, %s791
          %s793 = smul.addr %s792, 8
          %s794 = scalar_lea.hbm %s3, %s793
          %s796 = sshll.u32 %s785, 4
          %s797 = int_to_ptr.vmem [resolvable:$true] %s796
          %s798 = sshll.u32 %s794, 4
          %s799 = int_to_ptr.hbm [resolvable:$true] %s798
          %801 = dma.vmem_to_hbm [thread:$0]  %s797, 128, %s799, %s782
        $region44: #{tpu_custom_call.1} parent=31 // pred_fallthru
          _
      $region32: #{tpu_custom_call.1} parent=5 // pred_fallthru
        _
      %p802 = scmp.le.s32.totalorder 2, %s14
      // Predicated region
      $region45: #{tpu_custom_call.1} parent=5 // pred_check
        %p803 = pneg %p802
      $region46: #{tpu_custom_call.1} parent=5 // pred_check_branch
        %805 = sbr.rel (%p803) target = $region48
      $region47: #{tpu_custom_call.1} parent=5 // pred_region
        %s806 = ssub.s32 %s14, 2
        // Predicated region
        $region49: #{tpu_custom_call.1} parent=47 // pred_check
          %p807 = pneg %p125
        $region50: #{tpu_custom_call.1} parent=47 // pred_check_branch
          %809 = sbr.rel (%p807) target = $region52
        $region51: #{tpu_custom_call.1} parent=47 // pred_region
          %s810 = sand.u32 %s110, 1
          %s811 = scalar_lea.sflag [#allocation3], %s810
          %s812 = sand.u32 %s110, 1
          %s813 = smul.addr %s812, 8
          %s814 = scalar_lea.vmem [#allocation7], %s813
          %816 = dma.done %s811, 128
        $region52: #{tpu_custom_call.1} parent=47 // pred_fallthru
          _
      $region48: #{tpu_custom_call.1} parent=5 // pred_fallthru
        _
    $region6: #{tpu_custom_call.1} parent=1 // loop_footer
      %s18 = sadd.s32 1, %s14
    $region7: #{tpu_custom_call.1} parent=1 // loop_footer_branch
      %13 = sbr.rel target = $region3
    $region8: #{tpu_custom_call.1} parent=1 // loop_exit
      _
    %817 = vsyncpa [#allocation3], 1
    %s818 = scalar_lea.sflag [#allocation3], 1
    %819 = vsyncpa %s818, 1
    %820 = vsyncpa [#allocation4], 1
    %s821 = scalar_lea.sflag [#allocation4], 1
    %822 = vsyncpa %s821, 1
    %823 = vsyncpa [#allocation6], 1

</llo_original>
